<compile_context>
chip_gen: v5e
topology: v5e:2x2
jax: 0.10.0
libtpu: 0.0.40
codegen_flags: <defaults>
</compile_context>

<pallas_src>
import functools
import math

import jax
import jax.numpy as jnp
from jax.experimental import pallas as pl
from jax.experimental.pallas import tpu as pltpu


# ----------------------------- kernel helpers --------------------------------

def _torch_layernorm(x, g, b, eps=1e-6):
    """model/ca.py LayerNorm: a*(x-mean)/(std+eps)+b with torch's unbiased std.

    Uses one reciprocal per row (T reciprocals) instead of T*D divisions.
    """
    d = x.shape[-1]
    mu = jnp.mean(x, axis=-1, keepdims=True)
    xc = x - mu
    var = jnp.sum(xc * xc, axis=-1, keepdims=True) * (1.0 / (d - 1))
    inv = pl.reciprocal(jnp.sqrt(var) + eps)       # exact; eps is added to std
    return g * (xc * inv) + b


def _encoder_layer_kernel(seq_len, num_heads,
                          xs_ref, xo_ref,
                          wqv_ref, bqv_ref, wk_ref, bk_ref,
                          wo_ref, bo_ref, w1_ref, b1_ref, w2_ref, b2_ref,
                          g1_ref, be1_ref, g2_ref, be2_ref,
                          o_ref):
    f32 = jnp.float32
    bf16 = jnp.bfloat16

    # Path selection: grid step 0 = sample path (q=v=sample, k=origin),
    #                 grid step 1 = origin path (q=v=origin, k=sample).
    is_sample = pl.program_id(0) == 0
    xs = xs_ref[...]                       # [T, D] f32
    xo = xo_ref[...]                       # [T, D] f32
    xq = jnp.where(is_sample, xs, xo)      # query == value == residual
    xk = jnp.where(is_sample, xo, xs)      # key

    T, D = xq.shape
    H = num_heads
    dk = D // H
    S = seq_len
    bb = T // S                            # independent sequences in this block

    xq16 = xq.astype(bf16)
    xk16 = xk.astype(bf16)

    # ---- fused lane-dense projections (bf16 MXU operands, f32 accumulate) ----
    qv = jnp.dot(xq16, wqv_ref[...], preferred_element_type=f32) + bqv_ref[...]  # [T, 2D]
    k = jnp.dot(xk16, wk_ref[...], preferred_element_type=f32) + bk_ref[...]     # [T, D]
    q = qv[:, :D] * (1.0 / math.sqrt(dk))  # fold 1/sqrt(d_k) into Q
    v = qv[:, D:]                          # v == q-input in this module

    # ---- head split -> fused (head, batch) leading dim, batched attention ----
    def to_heads(x):                       # [T, D] f32 -> [H*bb, S, dk] bf16
        xh = jnp.stack([x[:, h * dk:(h + 1) * dk] for h in range(H)], axis=0)
        return xh.reshape(H * bb, S, dk).astype(bf16)

    qh = to_heads(q)
    kh = to_heads(k)
    vh = to_heads(v)

    s = jnp.einsum('bqd,bkd->bqk', qh, kh, preferred_element_type=f32)  # [H*bb,S,S]
    m = jnp.max(s, axis=-1, keepdims=True)
    p = jnp.exp(s - m)
    p = p * pl.reciprocal(jnp.sum(p, axis=-1, keepdims=True), approx=True)
    ctx = jnp.einsum('bqk,bkd->bqd', p.astype(bf16), vh,
                     preferred_element_type=f32)                        # [H*bb,S,dk]

    # ---- re-concat heads along features (torch head order), single out-proj ----
    ctx = ctx.reshape(H, T, dk)
    ctx_flat = jnp.concatenate([ctx[h] for h in range(H)], axis=-1)     # [T, D]
    attn = jnp.dot(ctx_flat.astype(bf16), wo_ref[...],
                   preferred_element_type=f32) + bo_ref[...]

    # ---- sublayer 0: LN(v + attn); v == q.  (dropout: identity in eval) ----
    x = _torch_layernorm(xq + attn, g1_ref[...], be1_ref[...])

    # ---- position-wise FFN + sublayer 1 ----
    h1 = jnp.dot(x.astype(bf16), w1_ref[...], preferred_element_type=f32) + b1_ref[...]
    h1 = jnp.maximum(h1, 0.0)
    ffn = jnp.dot(h1.astype(bf16), w2_ref[...], preferred_element_type=f32) + b2_ref[...]

    y = _torch_layernorm(x + ffn, g2_ref[...], be2_ref[...])
    o_ref[...] = y.astype(o_ref.dtype)


# ----------------------------- pallas_call wrapper ----------------------------

def cross_attention_forward(sample, origin, params, *, num_heads=None):
    """CrossAttention.forward: returns cat((x_sample, x_origin), dim=0).

    sample path: q=v=sample, k=origin ; origin path: q=v=origin, k=sample.
    Both paths share identical weights; a grid axis of size 2 selects the role
    of each input per step (no wrapper-side HBM concatenate needed).
    The Encoder's n-iteration loop is a mathematical no-op and is dropped.
    """
    B, S, D = sample.shape
    H = num_heads if num_heads is not None else params["num_heads"]
    F = params["w1"].shape[1]
    T = B * S

    xs = sample.reshape(T, D)              # free: contiguous reshape
    xo = origin.reshape(T, D)

    kernel = functools.partial(_encoder_layer_kernel, S, H)

    def rep(shape):                        # weight/param: same full block every step
        return pl.BlockSpec(shape, lambda i, _n=len(shape): (0,) * _n)

    seq_spec = pl.BlockSpec((T, D), lambda i: (0, 0))    # constant -> DMA'd once
    out_spec = pl.BlockSpec((T, D), lambda i: (i, 0))    # path i writes rows i*T:(i+1)*T

    in_specs = [
        seq_spec, seq_spec,                               # sample, origin
        rep((D, 2 * D)), rep((1, 2 * D)),                 # wqv, bqv
        rep((D, D)), rep((1, D)),                         # wk, bk
        rep((D, D)), rep((1, D)),                         # wo, bo
        rep((D, F)), rep((1, F)),                         # w1, b1
        rep((F, D)), rep((1, D)),                         # w2, b2
        rep((1, D)), rep((1, D)),                         # ln1 gamma/beta
        rep((1, D)), rep((1, D)),                         # ln2 gamma/beta
    ]

    out = pl.pallas_call(
        kernel,
        out_shape=jax.ShapeDtypeStruct((2 * T, D), sample.dtype),
        grid=(2,),
        in_specs=in_specs,
        out_specs=out_spec,
        compiler_params=pltpu.CompilerParams(
            dimension_semantics=("parallel",)),           # 2 steps -> both v7x TCs
    )(xs, xo,
      params["wqv"], params["bqv"], params["wk"], params["bk"],
      params["wo"], params["bo"], params["w1"], params["b1"],
      params["w2"], params["b2"],
      params["g1"], params["be1"], params["g2"], params["be2"])

    return out.reshape(2 * B, S, D)        # == torch.cat((x_sample, x_origin), 0)


# ----------------------------- parameter init ---------------------------------

def make_cross_attention_params(key, d_model, d_ff, h):
    """torch.nn.Linear-style init (U(+-1/sqrt(fan_in)) for W and b), packed for
    the kernel: Q and V projection weights fused column-wise into [D, 2D],
    matmul weights stored bf16, biases & LayerNorm params f32."""
    dk = d_model // h
    assert h * dk == d_model
    ks = jax.random.split(key, 12)

    def lin(kw, kb, fan_in, fan_out):
        bound = 1.0 / math.sqrt(fan_in)
        w = jax.random.uniform(kw, (fan_in, fan_out), jnp.float32, -bound, bound)
        b = jax.random.uniform(kb, (1, fan_out), jnp.float32, -bound, bound)
        return w, b

    wq, bq = lin(ks[0], ks[1], d_model, d_model)
    wk, bk = lin(ks[2], ks[3], d_model, d_model)
    wv, bv = lin(ks[4], ks[5], d_model, d_model)
    wo, bo = lin(ks[6], ks[7], d_model, d_model)
    w1, b1 = lin(ks[8], ks[9], d_model, d_ff)
    w2, b2 = lin(ks[10], ks[11], d_ff, d_model)

    return {
        "num_heads": h,
        "wqv": jnp.concatenate([wq, wv], axis=1).astype(jnp.bfloat16),
        "bqv": jnp.concatenate([bq, bv], axis=1),
        "wk": wk.astype(jnp.bfloat16), "bk": bk,
        "wo": wo.astype(jnp.bfloat16), "bo": bo,
        "w1": w1.astype(jnp.bfloat16), "b1": b1,
        "w2": w2.astype(jnp.bfloat16), "b2": b2,
        "g1": jnp.ones((1, d_model), jnp.float32),
        "be1": jnp.zeros((1, d_model), jnp.float32),
        "g2": jnp.ones((1, d_model), jnp.float32),
        "be2": jnp.zeros((1, d_model), jnp.float32),
    }


# ----------------------------------- main --------------------------------------

if __name__ == "__main__":
    # Small shapes consistent with CrossAttention (d_model divisible by h);
    # d_model=128 keeps all stores lane-dense on TPU.
    B, S, D, FF, H = 2, 8, 128, 256, 4

    root = jax.random.PRNGKey(0)
    k_sample, k_origin, k_params = jax.random.split(root, 3)

    sample = jax.random.normal(k_sample, (B, S, D), jnp.float32)
    origin = jax.random.normal(k_origin, (B, S, D), jnp.float32)
    params = make_cross_attention_params(k_params, d_model=D, d_ff=FF, h=H)

    out = cross_attention_forward(sample, origin, params, num_heads=H)
    jax.block_until_ready(out)

    assert out.shape == (2 * B, S, D)
    assert bool(jnp.all(jnp.isfinite(out)))
    print("KERNEL_OK")
</pallas_src>

<mosaic_0001>
module attributes {stable_mosaic.version = 11 : i64} {
  func.func @_encoder_layer_kernel(%arg0: i32, %arg1: memref<16x128xf32, #tpu.memory_space<vmem>>, %arg2: memref<16x128xf32, #tpu.memory_space<vmem>>, %arg3: memref<128x256xbf16, #tpu.memory_space<vmem>>, %arg4: memref<1x256xf32, #tpu.memory_space<vmem>>, %arg5: memref<128x128xbf16, #tpu.memory_space<vmem>>, %arg6: memref<1x128xf32, #tpu.memory_space<vmem>>, %arg7: memref<128x128xbf16, #tpu.memory_space<vmem>>, %arg8: memref<1x128xf32, #tpu.memory_space<vmem>>, %arg9: memref<128x256xbf16, #tpu.memory_space<vmem>>, %arg10: memref<1x256xf32, #tpu.memory_space<vmem>>, %arg11: memref<256x128xbf16, #tpu.memory_space<vmem>>, %arg12: memref<1x128xf32, #tpu.memory_space<vmem>>, %arg13: memref<1x128xf32, #tpu.memory_space<vmem>>, %arg14: memref<1x128xf32, #tpu.memory_space<vmem>>, %arg15: memref<1x128xf32, #tpu.memory_space<vmem>>, %arg16: memref<1x128xf32, #tpu.memory_space<vmem>>, %arg17: memref<16x128xf32, #tpu.memory_space<vmem>>) attributes {dimension_semantics = [#tpu.dimension_semantics<parallel>], iteration_bounds = array<i64: 2>, scalar_prefetch = 0 : i64, scratch_operands = 0 : i64, tpu.core_type = #tpu.core_type<tc>, window_params = [{pipeline_mode = #tpu.pipeline_mode<synchronous>, transform_indices = @transform_0, window_bounds = array<i64: 16, 128>}, {pipeline_mode = #tpu.pipeline_mode<synchronous>, transform_indices = @transform_1, window_bounds = array<i64: 16, 128>}, {pipeline_mode = #tpu.pipeline_mode<synchronous>, transform_indices = @transform_2, window_bounds = array<i64: 128, 256>}, {pipeline_mode = #tpu.pipeline_mode<synchronous>, transform_indices = @transform_3, window_bounds = array<i64: 1, 256>}, {pipeline_mode = #tpu.pipeline_mode<synchronous>, transform_indices = @transform_4, window_bounds = array<i64: 128, 128>}, {pipeline_mode = #tpu.pipeline_mode<synchronous>, transform_indices = @transform_5, window_bounds = array<i64: 1, 128>}, {pipeline_mode = #tpu.pipeline_mode<synchronous>, transform_indices = @transform_6, window_bounds = array<i64: 128, 128>}, {pipeline_mode = #tpu.pipeline_mode<synchronous>, transform_indices = @transform_7, window_bounds = array<i64: 1, 128>}, {pipeline_mode = #tpu.pipeline_mode<synchronous>, transform_indices = @transform_8, window_bounds = array<i64: 128, 256>}, {pipeline_mode = #tpu.pipeline_mode<synchronous>, transform_indices = @transform_9, window_bounds = array<i64: 1, 256>}, {pipeline_mode = #tpu.pipeline_mode<synchronous>, transform_indices = @transform_10, window_bounds = array<i64: 256, 128>}, {pipeline_mode = #tpu.pipeline_mode<synchronous>, transform_indices = @transform_11, window_bounds = array<i64: 1, 128>}, {pipeline_mode = #tpu.pipeline_mode<synchronous>, transform_indices = @transform_12, window_bounds = array<i64: 1, 128>}, {pipeline_mode = #tpu.pipeline_mode<synchronous>, transform_indices = @transform_13, window_bounds = array<i64: 1, 128>}, {pipeline_mode = #tpu.pipeline_mode<synchronous>, transform_indices = @transform_14, window_bounds = array<i64: 1, 128>}, {pipeline_mode = #tpu.pipeline_mode<synchronous>, transform_indices = @transform_15, window_bounds = array<i64: 1, 128>}, {transform_indices = @transform_16, window_bounds = array<i64: 16, 128>}]} {
    %c0_i32 = arith.constant 0 : i32
    %0 = arith.cmpi eq, %arg0, %c0_i32 : i32
    %c0 = arith.constant 0 : index
    %c0_0 = arith.constant 0 : index
    %1 = vector.load %arg1[%c0, %c0_0] : memref<16x128xf32, #tpu.memory_space<vmem>>, vector<16x128xf32>
    %c0_1 = arith.constant 0 : index
    %c0_2 = arith.constant 0 : index
    %2 = vector.load %arg2[%c0_1, %c0_2] : memref<16x128xf32, #tpu.memory_space<vmem>>, vector<16x128xf32>
    %3 = arith.select %0, %1, %2 : vector<16x128xf32>
    %4 = arith.select %0, %2, %1 : vector<16x128xf32>
    %5 = arith.truncf %3 : vector<16x128xf32> to vector<16x128xbf16>
    %6 = arith.truncf %4 : vector<16x128xf32> to vector<16x128xbf16>
    %c0_3 = arith.constant 0 : index
    %c0_4 = arith.constant 0 : index
    %7 = vector.load %arg3[%c0_3, %c0_4] : memref<128x256xbf16, #tpu.memory_space<vmem>>, vector<128x256xbf16>
    %cst = arith.constant dense<0.000000e+00> : vector<16x256xf32>
    %8 = tpu.matmul %5, %7, %cst {dimension_numbers = #tpu.dot_dimension_numbers<[1], [0], [0], [1], [0, 0, 1, 1], [], []>} : vector<16x128xbf16>, vector<128x256xbf16>, vector<16x256xf32> -> vector<16x256xf32>
    %c0_5 = arith.constant 0 : index
    %c0_6 = arith.constant 0 : index
    %9 = vector.load %arg4[%c0_5, %c0_6] : memref<1x256xf32, #tpu.memory_space<vmem>>, vector<1x256xf32>
    %10 = vector.broadcast %9 : vector<1x256xf32> to vector<16x256xf32>
    %11 = arith.addf %8, %10 : vector<16x256xf32>
    %c0_7 = arith.constant 0 : index
    %c0_8 = arith.constant 0 : index
    %12 = vector.load %arg5[%c0_7, %c0_8] : memref<128x128xbf16, #tpu.memory_space<vmem>>, vector<128x128xbf16>
    %cst_9 = arith.constant dense<0.000000e+00> : vector<16x128xf32>
    %13 = tpu.matmul %6, %12, %cst_9 {dimension_numbers = #tpu.dot_dimension_numbers<[1], [0], [0], [1], [0, 0, 1, 1], [], []>} : vector<16x128xbf16>, vector<128x128xbf16>, vector<16x128xf32> -> vector<16x128xf32>
    %c0_10 = arith.constant 0 : index
    %c0_11 = arith.constant 0 : index
    %14 = vector.load %arg6[%c0_10, %c0_11] : memref<1x128xf32, #tpu.memory_space<vmem>>, vector<1x128xf32>
    %15 = vector.broadcast %14 : vector<1x128xf32> to vector<16x128xf32>
    %16 = arith.addf %13, %15 : vector<16x128xf32>
    %17 = vector.extract_strided_slice %11 {offsets = [0, 0], sizes = [16, 128], strides = [1, 1]} : vector<16x256xf32> to vector<16x128xf32>
    %cst_12 = arith.constant 0.176776692 : f32
    %18 = vector.broadcast %cst_12 : f32 to vector<16x128xf32>
    %19 = arith.mulf %17, %18 : vector<16x128xf32>
    %20 = vector.extract_strided_slice %11 {offsets = [0, 128], sizes = [16, 128], strides = [1, 1]} : vector<16x256xf32> to vector<16x128xf32>
    %21 = vector.extract_strided_slice %19 {offsets = [0, 0], sizes = [16, 32], strides = [1, 1]} : vector<16x128xf32> to vector<16x32xf32>
    %22 = vector.extract_strided_slice %19 {offsets = [0, 32], sizes = [16, 32], strides = [1, 1]} : vector<16x128xf32> to vector<16x32xf32>
    %23 = vector.extract_strided_slice %19 {offsets = [0, 64], sizes = [16, 32], strides = [1, 1]} : vector<16x128xf32> to vector<16x32xf32>
    %24 = vector.extract_strided_slice %19 {offsets = [0, 96], sizes = [16, 32], strides = [1, 1]} : vector<16x128xf32> to vector<16x32xf32>
    %25 = vector.shape_cast %21 : vector<16x32xf32> to vector<1x16x32xf32>
    %26 = vector.shape_cast %22 : vector<16x32xf32> to vector<1x16x32xf32>
    %27 = vector.shape_cast %23 : vector<16x32xf32> to vector<1x16x32xf32>
    %28 = vector.shape_cast %24 : vector<16x32xf32> to vector<1x16x32xf32>
    %29 = tpu.concatenate %25, %26, %27, %28 in 0 : vector<1x16x32xf32>, vector<1x16x32xf32>, vector<1x16x32xf32>, vector<1x16x32xf32> -> vector<4x16x32xf32>
    %30 = vector.shape_cast %29 : vector<4x16x32xf32> to vector<8x8x32xf32>
    %31 = arith.truncf %30 : vector<8x8x32xf32> to vector<8x8x32xbf16>
    %32 = vector.extract_strided_slice %16 {offsets = [0, 0], sizes = [16, 32], strides = [1, 1]} : vector<16x128xf32> to vector<16x32xf32>
    %33 = vector.extract_strided_slice %16 {offsets = [0, 32], sizes = [16, 32], strides = [1, 1]} : vector<16x128xf32> to vector<16x32xf32>
    %34 = vector.extract_strided_slice %16 {offsets = [0, 64], sizes = [16, 32], strides = [1, 1]} : vector<16x128xf32> to vector<16x32xf32>
    %35 = vector.extract_strided_slice %16 {offsets = [0, 96], sizes = [16, 32], strides = [1, 1]} : vector<16x128xf32> to vector<16x32xf32>
    %36 = vector.shape_cast %32 : vector<16x32xf32> to vector<1x16x32xf32>
    %37 = vector.shape_cast %33 : vector<16x32xf32> to vector<1x16x32xf32>
    %38 = vector.shape_cast %34 : vector<16x32xf32> to vector<1x16x32xf32>
    %39 = vector.shape_cast %35 : vector<16x32xf32> to vector<1x16x32xf32>
    %40 = tpu.concatenate %36, %37, %38, %39 in 0 : vector<1x16x32xf32>, vector<1x16x32xf32>, vector<1x16x32xf32>, vector<1x16x32xf32> -> vector<4x16x32xf32>
    %41 = vector.shape_cast %40 : vector<4x16x32xf32> to vector<8x8x32xf32>
    %42 = arith.truncf %41 : vector<8x8x32xf32> to vector<8x8x32xbf16>
    %43 = vector.extract_strided_slice %20 {offsets = [0, 0], sizes = [16, 32], strides = [1, 1]} : vector<16x128xf32> to vector<16x32xf32>
    %44 = vector.extract_strided_slice %20 {offsets = [0, 32], sizes = [16, 32], strides = [1, 1]} : vector<16x128xf32> to vector<16x32xf32>
    %45 = vector.extract_strided_slice %20 {offsets = [0, 64], sizes = [16, 32], strides = [1, 1]} : vector<16x128xf32> to vector<16x32xf32>
    %46 = vector.extract_strided_slice %20 {offsets = [0, 96], sizes = [16, 32], strides = [1, 1]} : vector<16x128xf32> to vector<16x32xf32>
    %47 = vector.shape_cast %43 : vector<16x32xf32> to vector<1x16x32xf32>
    %48 = vector.shape_cast %44 : vector<16x32xf32> to vector<1x16x32xf32>
    %49 = vector.shape_cast %45 : vector<16x32xf32> to vector<1x16x32xf32>
    %50 = vector.shape_cast %46 : vector<16x32xf32> to vector<1x16x32xf32>
    %51 = tpu.concatenate %47, %48, %49, %50 in 0 : vector<1x16x32xf32>, vector<1x16x32xf32>, vector<1x16x32xf32>, vector<1x16x32xf32> -> vector<4x16x32xf32>
    %52 = vector.shape_cast %51 : vector<4x16x32xf32> to vector<8x8x32xf32>
    %53 = arith.truncf %52 : vector<8x8x32xf32> to vector<8x8x32xbf16>
    "tpu.trace_start"() <{level = 10 : i32, message = "bqd,bkd->bqk"}> : () -> ()
    %cst_13 = arith.constant dense<0.000000e+00> : vector<8x8x8xf32>
    %54 = tpu.matmul %31, %42, %cst_13 {dimension_numbers = #tpu.dot_dimension_numbers<[2], [2], [1], [1], [0, 0, 0, 1, 1, 1], [0], [0]>} : vector<8x8x32xbf16>, vector<8x8x32xbf16>, vector<8x8x8xf32> -> vector<8x8x8xf32>
    "tpu.trace_stop"() : () -> ()
    %cst_14 = arith.constant dense<0xFF800000> : vector<8x8xf32>
    %55 = vector.multi_reduction <maximumf>, %54, %cst_14 [2] : vector<8x8x8xf32> to vector<8x8xf32>
    %56 = vector.shape_cast %55 : vector<8x8xf32> to vector<8x8x1xf32>
    %57 = vector.broadcast %56 : vector<8x8x1xf32> to vector<8x8x8xf32>
    %58 = arith.subf %54, %57 : vector<8x8x8xf32>
    %59 = math.exp %58 : vector<8x8x8xf32>
    %cst_15 = arith.constant dense<0.000000e+00> : vector<8x8xf32>
    %60 = vector.multi_reduction <add>, %59, %cst_15 [2] : vector<8x8x8xf32> to vector<8x8xf32>
    %61 = vector.shape_cast %60 : vector<8x8xf32> to vector<8x8x1xf32>
    %62 = tpu.reciprocal %61 {approx = true} : vector<8x8x1xf32> -> vector<8x8x1xf32>
    %63 = vector.broadcast %62 : vector<8x8x1xf32> to vector<8x8x8xf32>
    %64 = arith.mulf %59, %63 : vector<8x8x8xf32>
    %65 = arith.truncf %64 : vector<8x8x8xf32> to vector<8x8x8xbf16>
    "tpu.trace_start"() <{level = 10 : i32, message = "bqk,bkd->bqd"}> : () -> ()
    %cst_16 = arith.constant dense<0.000000e+00> : vector<8x8x32xf32>
    %66 = tpu.matmul %65, %53, %cst_16 {dimension_numbers = #tpu.dot_dimension_numbers<[2], [1], [1], [2], [0, 0, 0, 1, 1, 2], [0], [0]>} : vector<8x8x8xbf16>, vector<8x8x32xbf16>, vector<8x8x32xf32> -> vector<8x8x32xf32>
    "tpu.trace_stop"() : () -> ()
    %67 = vector.shape_cast %66 : vector<8x8x32xf32> to vector<4x16x32xf32>
    %68 = vector.extract_strided_slice %67 {offsets = [0, 0, 0], sizes = [1, 16, 32], strides = [1, 1, 1]} : vector<4x16x32xf32> to vector<1x16x32xf32>
    %69 = vector.shape_cast %68 : vector<1x16x32xf32> to vector<16x32xf32>
    %70 = vector.extract_strided_slice %67 {offsets = [1, 0, 0], sizes = [1, 16, 32], strides = [1, 1, 1]} : vector<4x16x32xf32> to vector<1x16x32xf32>
    %71 = vector.shape_cast %70 : vector<1x16x32xf32> to vector<16x32xf32>
    %72 = vector.extract_strided_slice %67 {offsets = [2, 0, 0], sizes = [1, 16, 32], strides = [1, 1, 1]} : vector<4x16x32xf32> to vector<1x16x32xf32>
    %73 = vector.shape_cast %72 : vector<1x16x32xf32> to vector<16x32xf32>
    %74 = vector.extract_strided_slice %67 {offsets = [3, 0, 0], sizes = [1, 16, 32], strides = [1, 1, 1]} : vector<4x16x32xf32> to vector<1x16x32xf32>
    %75 = vector.shape_cast %74 : vector<1x16x32xf32> to vector<16x32xf32>
    %76 = tpu.concatenate %69, %71, %73, %75 in 1 : vector<16x32xf32>, vector<16x32xf32>, vector<16x32xf32>, vector<16x32xf32> -> vector<16x128xf32>
    %77 = arith.truncf %76 : vector<16x128xf32> to vector<16x128xbf16>
    %c0_17 = arith.constant 0 : index
    %c0_18 = arith.constant 0 : index
    %78 = vector.load %arg7[%c0_17, %c0_18] : memref<128x128xbf16, #tpu.memory_space<vmem>>, vector<128x128xbf16>
    %cst_19 = arith.constant dense<0.000000e+00> : vector<16x128xf32>
    %79 = tpu.matmul %77, %78, %cst_19 {dimension_numbers = #tpu.dot_dimension_numbers<[1], [0], [0], [1], [0, 0, 1, 1], [], []>} : vector<16x128xbf16>, vector<128x128xbf16>, vector<16x128xf32> -> vector<16x128xf32>
    %c0_20 = arith.constant 0 : index
    %c0_21 = arith.constant 0 : index
    %80 = vector.load %arg8[%c0_20, %c0_21] : memref<1x128xf32, #tpu.memory_space<vmem>>, vector<1x128xf32>
    %81 = vector.broadcast %80 : vector<1x128xf32> to vector<16x128xf32>
    %82 = arith.addf %79, %81 : vector<16x128xf32>
    %83 = arith.addf %3, %82 : vector<16x128xf32>
    %c0_22 = arith.constant 0 : index
    %c0_23 = arith.constant 0 : index
    %84 = vector.load %arg13[%c0_22, %c0_23] : memref<1x128xf32, #tpu.memory_space<vmem>>, vector<1x128xf32>
    %c0_24 = arith.constant 0 : index
    %c0_25 = arith.constant 0 : index
    %85 = vector.load %arg14[%c0_24, %c0_25] : memref<1x128xf32, #tpu.memory_space<vmem>>, vector<1x128xf32>
    %cst_26 = arith.constant dense<0.000000e+00> : vector<16xf32>
    %86 = vector.multi_reduction <add>, %83, %cst_26 [1] : vector<16x128xf32> to vector<16xf32>
    %87 = vector.shape_cast %86 : vector<16xf32> to vector<16x1xf32>
    %cst_27 = arith.constant 1.280000e+02 : f32
    %88 = vector.broadcast %cst_27 : f32 to vector<16x1xf32>
    %89 = arith.divf %87, %88 : vector<16x1xf32>
    %90 = vector.broadcast %89 : vector<16x1xf32> to vector<16x128xf32>
    %91 = arith.subf %83, %90 : vector<16x128xf32>
    %92 = arith.mulf %91, %91 : vector<16x128xf32>
    %cst_28 = arith.constant dense<0.000000e+00> : vector<16xf32>
    %93 = vector.multi_reduction <add>, %92, %cst_28 [1] : vector<16x128xf32> to vector<16xf32>
    %94 = vector.shape_cast %93 : vector<16xf32> to vector<16x1xf32>
    %cst_29 = arith.constant 0.00787401571 : f32
    %95 = vector.broadcast %cst_29 : f32 to vector<16x1xf32>
    %96 = arith.mulf %94, %95 : vector<16x1xf32>
    %97 = math.sqrt %96 : vector<16x1xf32>
    %cst_30 = arith.constant 9.99999997E-7 : f32
    %98 = vector.broadcast %cst_30 : f32 to vector<16x1xf32>
    %99 = arith.addf %97, %98 : vector<16x1xf32>
    %100 = tpu.reciprocal %99 : vector<16x1xf32> -> vector<16x1xf32>
    %101 = vector.broadcast %100 : vector<16x1xf32> to vector<16x128xf32>
    %102 = arith.mulf %91, %101 : vector<16x128xf32>
    %103 = vector.broadcast %84 : vector<1x128xf32> to vector<16x128xf32>
    %104 = arith.mulf %103, %102 : vector<16x128xf32>
    %105 = vector.broadcast %85 : vector<1x128xf32> to vector<16x128xf32>
    %106 = arith.addf %104, %105 : vector<16x128xf32>
    %107 = arith.truncf %106 : vector<16x128xf32> to vector<16x128xbf16>
    %c0_31 = arith.constant 0 : index
    %c0_32 = arith.constant 0 : index
    %108 = vector.load %arg9[%c0_31, %c0_32] : memref<128x256xbf16, #tpu.memory_space<vmem>>, vector<128x256xbf16>
    %cst_33 = arith.constant dense<0.000000e+00> : vector<16x256xf32>
    %109 = tpu.matmul %107, %108, %cst_33 {dimension_numbers = #tpu.dot_dimension_numbers<[1], [0], [0], [1], [0, 0, 1, 1], [], []>} : vector<16x128xbf16>, vector<128x256xbf16>, vector<16x256xf32> -> vector<16x256xf32>
    %c0_34 = arith.constant 0 : index
    %c0_35 = arith.constant 0 : index
    %110 = vector.load %arg10[%c0_34, %c0_35] : memref<1x256xf32, #tpu.memory_space<vmem>>, vector<1x256xf32>
    %111 = vector.broadcast %110 : vector<1x256xf32> to vector<16x256xf32>
    %112 = arith.addf %109, %111 : vector<16x256xf32>
    %cst_36 = arith.constant 0.000000e+00 : f32
    %113 = vector.broadcast %cst_36 : f32 to vector<16x256xf32>
    %114 = arith.maximumf %112, %113 : vector<16x256xf32>
    %115 = arith.truncf %114 : vector<16x256xf32> to vector<16x256xbf16>
    %c0_37 = arith.constant 0 : index
    %c0_38 = arith.constant 0 : index
    %116 = vector.load %arg11[%c0_37, %c0_38] : memref<256x128xbf16, #tpu.memory_space<vmem>>, vector<256x128xbf16>
    %cst_39 = arith.constant dense<0.000000e+00> : vector<16x128xf32>
    %117 = tpu.matmul %115, %116, %cst_39 {dimension_numbers = #tpu.dot_dimension_numbers<[1], [0], [0], [1], [0, 0, 1, 1], [], []>} : vector<16x256xbf16>, vector<256x128xbf16>, vector<16x128xf32> -> vector<16x128xf32>
    %c0_40 = arith.constant 0 : index
    %c0_41 = arith.constant 0 : index
    %118 = vector.load %arg12[%c0_40, %c0_41] : memref<1x128xf32, #tpu.memory_space<vmem>>, vector<1x128xf32>
    %119 = vector.broadcast %118 : vector<1x128xf32> to vector<16x128xf32>
    %120 = arith.addf %117, %119 : vector<16x128xf32>
    %121 = arith.addf %106, %120 : vector<16x128xf32>
    %c0_42 = arith.constant 0 : index
    %c0_43 = arith.constant 0 : index
    %122 = vector.load %arg15[%c0_42, %c0_43] : memref<1x128xf32, #tpu.memory_space<vmem>>, vector<1x128xf32>
    %c0_44 = arith.constant 0 : index
    %c0_45 = arith.constant 0 : index
    %123 = vector.load %arg16[%c0_44, %c0_45] : memref<1x128xf32, #tpu.memory_space<vmem>>, vector<1x128xf32>
    %cst_46 = arith.constant dense<0.000000e+00> : vector<16xf32>
    %124 = vector.multi_reduction <add>, %121, %cst_46 [1] : vector<16x128xf32> to vector<16xf32>
    %125 = vector.shape_cast %124 : vector<16xf32> to vector<16x1xf32>
    %cst_47 = arith.constant 1.280000e+02 : f32
    %126 = vector.broadcast %cst_47 : f32 to vector<16x1xf32>
    %127 = arith.divf %125, %126 : vector<16x1xf32>
    %128 = vector.broadcast %127 : vector<16x1xf32> to vector<16x128xf32>
    %129 = arith.subf %121, %128 : vector<16x128xf32>
    %130 = arith.mulf %129, %129 : vector<16x128xf32>
    %cst_48 = arith.constant dense<0.000000e+00> : vector<16xf32>
    %131 = vector.multi_reduction <add>, %130, %cst_48 [1] : vector<16x128xf32> to vector<16xf32>
    %132 = vector.shape_cast %131 : vector<16xf32> to vector<16x1xf32>
    %cst_49 = arith.constant 0.00787401571 : f32
    %133 = vector.broadcast %cst_49 : f32 to vector<16x1xf32>
    %134 = arith.mulf %132, %133 : vector<16x1xf32>
    %135 = math.sqrt %134 : vector<16x1xf32>
    %cst_50 = arith.constant 9.99999997E-7 : f32
    %136 = vector.broadcast %cst_50 : f32 to vector<16x1xf32>
    %137 = arith.addf %135, %136 : vector<16x1xf32>
    %138 = tpu.reciprocal %137 : vector<16x1xf32> -> vector<16x1xf32>
    %139 = vector.broadcast %138 : vector<16x1xf32> to vector<16x128xf32>
    %140 = arith.mulf %129, %139 : vector<16x128xf32>
    %141 = vector.broadcast %122 : vector<1x128xf32> to vector<16x128xf32>
    %142 = arith.mulf %141, %140 : vector<16x128xf32>
    %143 = vector.broadcast %123 : vector<1x128xf32> to vector<16x128xf32>
    %144 = arith.addf %142, %143 : vector<16x128xf32>
    %c0_51 = arith.constant 0 : index
    %c0_52 = arith.constant 0 : index
    %145 = vector.load %arg17[%c0_51, %c0_52] : memref<16x128xf32, #tpu.memory_space<vmem>>, vector<16x128xf32>
    tpu.vector_store %arg17[%c0_51, %c0_52], %144 {strides = array<i32>} : memref<16x128xf32, #tpu.memory_space<vmem>>, vector<16x128xf32>,
    return
  }
  func.func @transform_0(%arg0: i32) -> (i32, i32) {
    %c0_i32 = arith.constant 0 : i32
    %c0_i32_0 = arith.constant 0 : i32
    %c0_i32_1 = arith.constant 0 : i32
    return %c0_i32, %c0_i32_0 : i32, i32
  }
  func.func @transform_1(%arg0: i32) -> (i32, i32) {
    %c0_i32 = arith.constant 0 : i32
    %c0_i32_0 = arith.constant 0 : i32
    %c0_i32_1 = arith.constant 0 : i32
    return %c0_i32, %c0_i32_0 : i32, i32
  }
  func.func @transform_2(%arg0: i32) -> (i32, i32) {
    %c0_i32 = arith.constant 0 : i32
    %c0_i32_0 = arith.constant 0 : i32
    %c0_i32_1 = arith.constant 0 : i32
    return %c0_i32, %c0_i32_0 : i32, i32
  }
  func.func @transform_3(%arg0: i32) -> (i32, i32) {
    %c0_i32 = arith.constant 0 : i32
    %c0_i32_0 = arith.constant 0 : i32
    %c0_i32_1 = arith.constant 0 : i32
    return %c0_i32, %c0_i32_0 : i32, i32
  }
  func.func @transform_4(%arg0: i32) -> (i32, i32) {
    %c0_i32 = arith.constant 0 : i32
    %c0_i32_0 = arith.constant 0 : i32
    %c0_i32_1 = arith.constant 0 : i32
    return %c0_i32, %c0_i32_0 : i32, i32
  }
  func.func @transform_5(%arg0: i32) -> (i32, i32) {
    %c0_i32 = arith.constant 0 : i32
    %c0_i32_0 = arith.constant 0 : i32
    %c0_i32_1 = arith.constant 0 : i32
    return %c0_i32, %c0_i32_0 : i32, i32
  }
  func.func @transform_6(%arg0: i32) -> (i32, i32) {
    %c0_i32 = arith.constant 0 : i32
    %c0_i32_0 = arith.constant 0 : i32
    %c0_i32_1 = arith.constant 0 : i32
    return %c0_i32, %c0_i32_0 : i32, i32
  }
  func.func @transform_7(%arg0: i32) -> (i32, i32) {
    %c0_i32 = arith.constant 0 : i32
    %c0_i32_0 = arith.constant 0 : i32
    %c0_i32_1 = arith.constant 0 : i32
    return %c0_i32, %c0_i32_0 : i32, i32
  }
  func.func @transform_8(%arg0: i32) -> (i32, i32) {
    %c0_i32 = arith.constant 0 : i32
    %c0_i32_0 = arith.constant 0 : i32
    %c0_i32_1 = arith.constant 0 : i32
    return %c0_i32, %c0_i32_0 : i32, i32
  }
  func.func @transform_9(%arg0: i32) -> (i32, i32) {
    %c0_i32 = arith.constant 0 : i32
    %c0_i32_0 = arith.constant 0 : i32
    %c0_i32_1 = arith.constant 0 : i32
    return %c0_i32, %c0_i32_0 : i32, i32
  }
  func.func @transform_10(%arg0: i32) -> (i32, i32) {
    %c0_i32 = arith.constant 0 : i32
    %c0_i32_0 = arith.constant 0 : i32
    %c0_i32_1 = arith.constant 0 : i32
    return %c0_i32, %c0_i32_0 : i32, i32
  }
  func.func @transform_11(%arg0: i32) -> (i32, i32) {
    %c0_i32 = arith.constant 0 : i32
    %c0_i32_0 = arith.constant 0 : i32
    %c0_i32_1 = arith.constant 0 : i32
    return %c0_i32, %c0_i32_0 : i32, i32
  }
  func.func @transform_12(%arg0: i32) -> (i32, i32) {
    %c0_i32 = arith.constant 0 : i32
    %c0_i32_0 = arith.constant 0 : i32
    %c0_i32_1 = arith.constant 0 : i32
    return %c0_i32, %c0_i32_0 : i32, i32
  }
  func.func @transform_13(%arg0: i32) -> (i32, i32) {
    %c0_i32 = arith.constant 0 : i32
    %c0_i32_0 = arith.constant 0 : i32
    %c0_i32_1 = arith.constant 0 : i32
    return %c0_i32, %c0_i32_0 : i32, i32
  }
  func.func @transform_14(%arg0: i32) -> (i32, i32) {
    %c0_i32 = arith.constant 0 : i32
    %c0_i32_0 = arith.constant 0 : i32
    %c0_i32_1 = arith.constant 0 : i32
    return %c0_i32, %c0_i32_0 : i32, i32
  }
  func.func @transform_15(%arg0: i32) -> (i32, i32) {
    %c0_i32 = arith.constant 0 : i32
    %c0_i32_0 = arith.constant 0 : i32
    %c0_i32_1 = arith.constant 0 : i32
    return %c0_i32, %c0_i32_0 : i32, i32
  }
  func.func @transform_16(%arg0: i32) -> (i32, i32) {
    %c0_i32 = arith.constant 0 : i32
    %c0_i32_0 = arith.constant 0 : i32
    return %arg0, %c0_i32 : i32, i32
  }
}

</mosaic_0001>

<llo_original>
// kernel: tpu_custom_call.1
$region0: #{tpu_custom_call.1}
  #allocation0 [shape = 'u32[]', space=smem, size = 0x4, offset = 0x4, fixed_abs, tag = 'smem constant byte address 0x4 - core index']
  #allocation1 [shape = 'u32[72,128]{1,0:T(1,128)}', space=vmem, size = 0x9000, scoped, tag = 'internal scratch']
  %s0 = inlined_call_operand.hbm [shape: f32[16,128], index: 0, kind: input, shape index: {}]
  %s1 = inlined_call_operand.hbm [shape: f32[16,128], index: 1, kind: input, shape index: {}]
  %s2 = inlined_call_operand.hbm [shape: bf16[128,256], index: 2, kind: input, shape index: {}]
  %s3 = inlined_call_operand.vmem [shape: f32[1,256], index: 3, kind: input, shape index: {}]
  %s4 = inlined_call_operand.hbm [shape: bf16[128,128], index: 4, kind: input, shape index: {}]
  %s5 = inlined_call_operand.hbm [shape: f32[1,128], index: 5, kind: input, shape index: {}]
  %s6 = inlined_call_operand.hbm [shape: bf16[128,128], index: 6, kind: input, shape index: {}]
  %s7 = inlined_call_operand.vmem [shape: f32[1,128], index: 7, kind: input, shape index: {}]
  %s8 = inlined_call_operand.hbm [shape: bf16[128,256], index: 8, kind: input, shape index: {}]
  %s9 = inlined_call_operand.vmem [shape: f32[1,256], index: 9, kind: input, shape index: {}]
  %s10 = inlined_call_operand.hbm [shape: bf16[256,128], index: 10, kind: input, shape index: {}]
  %s11 = inlined_call_operand.vmem [shape: f32[1,128], index: 11, kind: input, shape index: {}]
  %s12 = inlined_call_operand.vmem [shape: f32[1,128], index: 12, kind: input, shape index: {}]
  %s13 = inlined_call_operand.vmem [shape: f32[1,128], index: 13, kind: input, shape index: {}]
  %s14 = inlined_call_operand.vmem [shape: f32[1,128], index: 14, kind: input, shape index: {}]
  %s15 = inlined_call_operand.vmem [shape: f32[1,128], index: 15, kind: input, shape index: {}]
  %s16 = inlined_call_operand.hbm [shape: f32[32,128], index: 16, kind: output, shape index: {}]
  %s17 = sld [smem:[#allocation0]]
  $region129: #{tpu_custom_call.1} parent=0
    _
  %s19 = ssub.s32 1, %s17
  %s20 = scalar_select 0, %s19, %s17
  $region1: #{tpu_custom_call.1} parent=0
    #allocation2 [shape = 'u8[8192]{0}', space=vmem, size = 0x2000, scoped, tag = 'input window, operand 0, single buffered']
    #allocation3 [shape = 's32[2]{0}', space=sflag, size = 0x8, scoped, tag = 'scoped memory for tpu_custom_call.1']
    #allocation4 [shape = 's32[2]{0}', space=sflag, size = 0x8, scoped, tag = 'scoped memory for tpu_custom_call.1']
    #allocation5 [shape = 'u8[8192]{0}', space=vmem, size = 0x2000, scoped, tag = 'input window, operand 1, single buffered']
    #allocation6 [shape = 's32[1]{0}', space=sflag, size = 0x4, scoped, tag = 'scoped memory for tpu_custom_call.1']
    #allocation7 [shape = 'u8[65536]{0}', space=vmem, size = 0x10000, scoped, tag = 'input window, operand 2, single buffered']
    #allocation8 [shape = 'u8[32768]{0}', space=vmem, size = 0x8000, scoped, tag = 'input window, operand 4, single buffered']
    #allocation9 [shape = 's32[1]{0}', space=sflag, size = 0x4, scoped, tag = 'scoped memory for tpu_custom_call.1']
    #allocation10 [shape = 'u8[512]{0}', space=vmem, size = 0x400, scoped, tag = 'input window, operand 5, single buffered']
    #allocation11 [shape = 'u8[32768]{0}', space=vmem, size = 0x8000, scoped, tag = 'input window, operand 6, single buffered']
    #allocation12 [shape = 's32[1]{0}', space=sflag, size = 0x4, scoped, tag = 'scoped memory for tpu_custom_call.1']
    #allocation13 [shape = 'u8[65536]{0}', space=vmem, size = 0x10000, scoped, tag = 'input window, operand 8, single buffered']
    #allocation14 [shape = 'u8[65536]{0}', space=vmem, size = 0x10000, scoped, tag = 'input window, operand 10, single buffered']
    #allocation15 [shape = 's32[1]{0}', space=sflag, size = 0x4, scoped, tag = 'scoped memory for tpu_custom_call.1']
    #allocation16 [shape = 'u8[16384]{0}', space=vmem, size = 0x4000, scoped, tag = 'output window, operand 0']
    %21 = vsyncpa [#allocation3], 0
    %22 = vsyncpa [#allocation6], 0
    %23 = vsyncpa [#allocation9], 0
    %24 = vsyncpa [#allocation12], 0
    %25 = vsyncpa [#allocation15], 0
    %26 = vsyncpa [#allocation4], 0
    %s27 = scalar_lea.sflag [#allocation4], 1
    %28 = vsyncpa %s27, 0
    loop: start=0, step=1, limit=4
    $region2: #{tpu_custom_call.1} parent=1 // loop_pre_header
      _
    $region3: #{tpu_custom_call.1} parent=1 // loop_header
      %s30 = sphi 0, %s34
      %p31 = scmp.ge.s32.totalorder %s30, 4
      %s38 = sphi 0, %s38
      %s40 = sphi 0, %s38
      %s41 = sphi 0, %s40
      %s55 = sphi 0, %s41
      %s59 = sphi 0, %s59
      %s61 = sphi 0, %s59
      %s62 = sphi 0, %s61
      %s76 = sphi 0, %s62
      %s80 = sphi 0, %s80
      %s82 = sphi 0, %s80
      %s83 = sphi 0, %s82
      %s97 = sphi 0, %s83
      %s101 = sphi 0, %s101
      %s103 = sphi 0, %s101
      %s104 = sphi 0, %s103
      %s118 = sphi 0, %s104
      %s122 = sphi 0, %s122
      %s124 = sphi 0, %s122
      %s125 = sphi 0, %s124
      %s139 = sphi 0, %s125
      %s143 = sphi 0, %s143
      %s145 = sphi 0, %s143
      %s146 = sphi 0, %s145
      %s160 = sphi 0, %s146
      %s164 = sphi 0, %s164
      %s166 = sphi 0, %s164
      %s167 = sphi 0, %s166
      %s181 = sphi 0, %s167
      %s185 = sphi 0, %s185
      %s187 = sphi 0, %s185
      %s188 = sphi 0, %s187
      %s202 = sphi 0, %s188
      %s206 = sphi 0, %s206
      %s208 = sphi 0, %s206
      %s209 = sphi 0, %s208
      %s223 = sphi 0, %s209
      %s227 = sphi 0, %s227
      %s229 = sphi 0, %s227
      %s230 = sphi 0, %s229
      %s244 = sphi 0, %s230
      %s248 = sphi 0, %s248
      %s250 = sphi 0, %s248
      %s251 = sphi 0, %s250
      %s265 = sphi 0, %s251
      %s269 = sphi 0, %s269
      %s271 = sphi 0, %s269
      %s272 = sphi 0, %s271
      %s286 = sphi 0, %s272
      %s290 = sphi 0, %s290
      %s292 = sphi 0, %s290
      %s293 = sphi 0, %s292
      %s307 = sphi 0, %s293
      %s311 = sphi 0, %s311
      %s313 = sphi 0, %s311
      %s314 = sphi 0, %s313
      %s328 = sphi 0, %s314
      %s332 = sphi 0, %s332
      %s334 = sphi 0, %s332
      %s335 = sphi 0, %s334
      %s349 = sphi 0, %s335
      %s353 = sphi 0, %s353
      %s355 = sphi 0, %s353
      %s356 = sphi 0, %s355
      %s370 = sphi 0, %s356
      %s376 = sphi 0, %s378
      %s379 = sphi 0, %s376
      %s380 = sphi 0, %s379
      %s396 = sphi 0, %s380
    $region4: #{tpu_custom_call.1} parent=1 // loop_header_branch
      %33 = sbr.rel (%p31) target = $region8
    $region5: #{tpu_custom_call.1} parent=1 // loop_body
      %s35 = ssub.s32 %s30, 1
      %s36 = ssub.s32 %s30, 2
      %s37 = sadd.s32 %s30, 1
      %s39 = sadd.s32 %s38, 1
      %p42 = scmp.eq.s32.totalorder %s30, 1
      %p43 = scmp.ne.s32.totalorder %s38, %s40
      %p44 = scmp.eq.s32.totalorder %s30, 0
      %p45 = por %p43, %p44
      %p46 = scmp.ne.s32.totalorder %s38, %s40
      %p47 = scmp.eq.s32.totalorder %s35, 1
      %p48 = por %p46, %p47
      %p49 = scmp.ne.s32.totalorder %s40, %s41
      %p50 = scmp.eq.s32.totalorder %s35, 0
      %p51 = por %p49, %p50
      %p52 = scmp.ne.s32.totalorder %s40, %s41
      %p53 = scmp.eq.s32.totalorder %s36, 1
      %p54 = por %p52, %p53
      %p56 = scmp.ne.s32.totalorder %s41, %s55
      %p57 = scmp.eq.s32.totalorder %s36, 0
      %p58 = por %p56, %p57
      %s60 = sadd.s32 %s59, 1
      %p63 = scmp.eq.s32.totalorder %s30, 1
      %p64 = scmp.ne.s32.totalorder %s59, %s61
      %p65 = scmp.eq.s32.totalorder %s30, 0
      %p66 = por %p64, %p65
      %p67 = scmp.ne.s32.totalorder %s59, %s61
      %p68 = scmp.eq.s32.totalorder %s35, 1
      %p69 = por %p67, %p68
      %p70 = scmp.ne.s32.totalorder %s61, %s62
      %p71 = scmp.eq.s32.totalorder %s35, 0
      %p72 = por %p70, %p71
      %p73 = scmp.ne.s32.totalorder %s61, %s62
      %p74 = scmp.eq.s32.totalorder %s36, 1
      %p75 = por %p73, %p74
      %p77 = scmp.ne.s32.totalorder %s62, %s76
      %p78 = scmp.eq.s32.totalorder %s36, 0
      %p79 = por %p77, %p78
      %s81 = sadd.s32 %s80, 1
      %p84 = scmp.eq.s32.totalorder %s30, 1
      %p85 = scmp.ne.s32.totalorder %s80, %s82
      %p86 = scmp.eq.s32.totalorder %s30, 0
      %p87 = por %p85, %p86
      %p88 = scmp.ne.s32.totalorder %s80, %s82
      %p89 = scmp.eq.s32.totalorder %s35, 1
      %p90 = por %p88, %p89
      %p91 = scmp.ne.s32.totalorder %s82, %s83
      %p92 = scmp.eq.s32.totalorder %s35, 0
      %p93 = por %p91, %p92
      %p94 = scmp.ne.s32.totalorder %s82, %s83
      %p95 = scmp.eq.s32.totalorder %s36, 1
      %p96 = por %p94, %p95
      %p98 = scmp.ne.s32.totalorder %s83, %s97
      %p99 = scmp.eq.s32.totalorder %s36, 0
      %p100 = por %p98, %p99
      %s102 = sadd.s32 %s101, 1
      %p105 = scmp.eq.s32.totalorder %s30, 1
      %p106 = scmp.ne.s32.totalorder %s101, %s103
      %p107 = scmp.eq.s32.totalorder %s30, 0
      %p108 = por %p106, %p107
      %p109 = scmp.ne.s32.totalorder %s101, %s103
      %p110 = scmp.eq.s32.totalorder %s35, 1
      %p111 = por %p109, %p110
      %p112 = scmp.ne.s32.totalorder %s103, %s104
      %p113 = scmp.eq.s32.totalorder %s35, 0
      %p114 = por %p112, %p113
      %p115 = scmp.ne.s32.totalorder %s103, %s104
      %p116 = scmp.eq.s32.totalorder %s36, 1
      %p117 = por %p115, %p116
      %p119 = scmp.ne.s32.totalorder %s104, %s118
      %p120 = scmp.eq.s32.totalorder %s36, 0
      %p121 = por %p119, %p120
      %s123 = sadd.s32 %s122, 1
      %p126 = scmp.eq.s32.totalorder %s30, 1
      %p127 = scmp.ne.s32.totalorder %s122, %s124
      %p128 = scmp.eq.s32.totalorder %s30, 0
      %p129 = por %p127, %p128
      %p130 = scmp.ne.s32.totalorder %s122, %s124
      %p131 = scmp.eq.s32.totalorder %s35, 1
      %p132 = por %p130, %p131
      %p133 = scmp.ne.s32.totalorder %s124, %s125
      %p134 = scmp.eq.s32.totalorder %s35, 0
      %p135 = por %p133, %p134
      %p136 = scmp.ne.s32.totalorder %s124, %s125
      %p137 = scmp.eq.s32.totalorder %s36, 1
      %p138 = por %p136, %p137
      %p140 = scmp.ne.s32.totalorder %s125, %s139
      %p141 = scmp.eq.s32.totalorder %s36, 0
      %p142 = por %p140, %p141
      %s144 = sadd.s32 %s143, 1
      %p147 = scmp.eq.s32.totalorder %s30, 1
      %p148 = scmp.ne.s32.totalorder %s143, %s145
      %p149 = scmp.eq.s32.totalorder %s30, 0
      %p150 = por %p148, %p149
      %p151 = scmp.ne.s32.totalorder %s143, %s145
      %p152 = scmp.eq.s32.totalorder %s35, 1
      %p153 = por %p151, %p152
      %p154 = scmp.ne.s32.totalorder %s145, %s146
      %p155 = scmp.eq.s32.totalorder %s35, 0
      %p156 = por %p154, %p155
      %p157 = scmp.ne.s32.totalorder %s145, %s146
      %p158 = scmp.eq.s32.totalorder %s36, 1
      %p159 = por %p157, %p158
      %p161 = scmp.ne.s32.totalorder %s146, %s160
      %p162 = scmp.eq.s32.totalorder %s36, 0
      %p163 = por %p161, %p162
      %s165 = sadd.s32 %s164, 1
      %p168 = scmp.eq.s32.totalorder %s30, 1
      %p169 = scmp.ne.s32.totalorder %s164, %s166
      %p170 = scmp.eq.s32.totalorder %s30, 0
      %p171 = por %p169, %p170
      %p172 = scmp.ne.s32.totalorder %s164, %s166
      %p173 = scmp.eq.s32.totalorder %s35, 1
      %p174 = por %p172, %p173
      %p175 = scmp.ne.s32.totalorder %s166, %s167
      %p176 = scmp.eq.s32.totalorder %s35, 0
      %p177 = por %p175, %p176
      %p178 = scmp.ne.s32.totalorder %s166, %s167
      %p179 = scmp.eq.s32.totalorder %s36, 1
      %p180 = por %p178, %p179
      %p182 = scmp.ne.s32.totalorder %s167, %s181
      %p183 = scmp.eq.s32.totalorder %s36, 0
      %p184 = por %p182, %p183
      %s186 = sadd.s32 %s185, 1
      %p189 = scmp.eq.s32.totalorder %s30, 1
      %p190 = scmp.ne.s32.totalorder %s185, %s187
      %p191 = scmp.eq.s32.totalorder %s30, 0
      %p192 = por %p190, %p191
      %p193 = scmp.ne.s32.totalorder %s185, %s187
      %p194 = scmp.eq.s32.totalorder %s35, 1
      %p195 = por %p193, %p194
      %p196 = scmp.ne.s32.totalorder %s187, %s188
      %p197 = scmp.eq.s32.totalorder %s35, 0
      %p198 = por %p196, %p197
      %p199 = scmp.ne.s32.totalorder %s187, %s188
      %p200 = scmp.eq.s32.totalorder %s36, 1
      %p201 = por %p199, %p200
      %p203 = scmp.ne.s32.totalorder %s188, %s202
      %p204 = scmp.eq.s32.totalorder %s36, 0
      %p205 = por %p203, %p204
      %s207 = sadd.s32 %s206, 1
      %p210 = scmp.eq.s32.totalorder %s30, 1
      %p211 = scmp.ne.s32.totalorder %s206, %s208
      %p212 = scmp.eq.s32.totalorder %s30, 0
      %p213 = por %p211, %p212
      %p214 = scmp.ne.s32.totalorder %s206, %s208
      %p215 = scmp.eq.s32.totalorder %s35, 1
      %p216 = por %p214, %p215
      %p217 = scmp.ne.s32.totalorder %s208, %s209
      %p218 = scmp.eq.s32.totalorder %s35, 0
      %p219 = por %p217, %p218
      %p220 = scmp.ne.s32.totalorder %s208, %s209
      %p221 = scmp.eq.s32.totalorder %s36, 1
      %p222 = por %p220, %p221
      %p224 = scmp.ne.s32.totalorder %s209, %s223
      %p225 = scmp.eq.s32.totalorder %s36, 0
      %p226 = por %p224, %p225
      %s228 = sadd.s32 %s227, 1
      %p231 = scmp.eq.s32.totalorder %s30, 1
      %p232 = scmp.ne.s32.totalorder %s227, %s229
      %p233 = scmp.eq.s32.totalorder %s30, 0
      %p234 = por %p232, %p233
      %p235 = scmp.ne.s32.totalorder %s227, %s229
      %p236 = scmp.eq.s32.totalorder %s35, 1
      %p237 = por %p235, %p236
      %p238 = scmp.ne.s32.totalorder %s229, %s230
      %p239 = scmp.eq.s32.totalorder %s35, 0
      %p240 = por %p238, %p239
      %p241 = scmp.ne.s32.totalorder %s229, %s230
      %p242 = scmp.eq.s32.totalorder %s36, 1
      %p243 = por %p241, %p242
      %p245 = scmp.ne.s32.totalorder %s230, %s244
      %p246 = scmp.eq.s32.totalorder %s36, 0
      %p247 = por %p245, %p246
      %s249 = sadd.s32 %s248, 1
      %p252 = scmp.eq.s32.totalorder %s30, 1
      %p253 = scmp.ne.s32.totalorder %s248, %s250
      %p254 = scmp.eq.s32.totalorder %s30, 0
      %p255 = por %p253, %p254
      %p256 = scmp.ne.s32.totalorder %s248, %s250
      %p257 = scmp.eq.s32.totalorder %s35, 1
      %p258 = por %p256, %p257
      %p259 = scmp.ne.s32.totalorder %s250, %s251
      %p260 = scmp.eq.s32.totalorder %s35, 0
      %p261 = por %p259, %p260
      %p262 = scmp.ne.s32.totalorder %s250, %s251
      %p263 = scmp.eq.s32.totalorder %s36, 1
      %p264 = por %p262, %p263
      %p266 = scmp.ne.s32.totalorder %s251, %s265
      %p267 = scmp.eq.s32.totalorder %s36, 0
      %p268 = por %p266, %p267
      %s270 = sadd.s32 %s269, 1
      %p273 = scmp.eq.s32.totalorder %s30, 1
      %p274 = scmp.ne.s32.totalorder %s269, %s271
      %p275 = scmp.eq.s32.totalorder %s30, 0
      %p276 = por %p274, %p275
      %p277 = scmp.ne.s32.totalorder %s269, %s271
      %p278 = scmp.eq.s32.totalorder %s35, 1
      %p279 = por %p277, %p278
      %p280 = scmp.ne.s32.totalorder %s271, %s272
      %p281 = scmp.eq.s32.totalorder %s35, 0
      %p282 = por %p280, %p281
      %p283 = scmp.ne.s32.totalorder %s271, %s272
      %p284 = scmp.eq.s32.totalorder %s36, 1
      %p285 = por %p283, %p284
      %p287 = scmp.ne.s32.totalorder %s272, %s286
      %p288 = scmp.eq.s32.totalorder %s36, 0
      %p289 = por %p287, %p288
      %s291 = sadd.s32 %s290, 1
      %p294 = scmp.eq.s32.totalorder %s30, 1
      %p295 = scmp.ne.s32.totalorder %s290, %s292
      %p296 = scmp.eq.s32.totalorder %s30, 0
      %p297 = por %p295, %p296
      %p298 = scmp.ne.s32.totalorder %s290, %s292
      %p299 = scmp.eq.s32.totalorder %s35, 1
      %p300 = por %p298, %p299
      %p301 = scmp.ne.s32.totalorder %s292, %s293
      %p302 = scmp.eq.s32.totalorder %s35, 0
      %p303 = por %p301, %p302
      %p304 = scmp.ne.s32.totalorder %s292, %s293
      %p305 = scmp.eq.s32.totalorder %s36, 1
      %p306 = por %p304, %p305
      %p308 = scmp.ne.s32.totalorder %s293, %s307
      %p309 = scmp.eq.s32.totalorder %s36, 0
      %p310 = por %p308, %p309
      %s312 = sadd.s32 %s311, 1
      %p315 = scmp.eq.s32.totalorder %s30, 1
      %p316 = scmp.ne.s32.totalorder %s311, %s313
      %p317 = scmp.eq.s32.totalorder %s30, 0
      %p318 = por %p316, %p317
      %p319 = scmp.ne.s32.totalorder %s311, %s313
      %p320 = scmp.eq.s32.totalorder %s35, 1
      %p321 = por %p319, %p320
      %p322 = scmp.ne.s32.totalorder %s313, %s314
      %p323 = scmp.eq.s32.totalorder %s35, 0
      %p324 = por %p322, %p323
      %p325 = scmp.ne.s32.totalorder %s313, %s314
      %p326 = scmp.eq.s32.totalorder %s36, 1
      %p327 = por %p325, %p326
      %p329 = scmp.ne.s32.totalorder %s314, %s328
      %p330 = scmp.eq.s32.totalorder %s36, 0
      %p331 = por %p329, %p330
      %s333 = sadd.s32 %s332, 1
      %p336 = scmp.eq.s32.totalorder %s30, 1
      %p337 = scmp.ne.s32.totalorder %s332, %s334
      %p338 = scmp.eq.s32.totalorder %s30, 0
      %p339 = por %p337, %p338
      %p340 = scmp.ne.s32.totalorder %s332, %s334
      %p341 = scmp.eq.s32.totalorder %s35, 1
      %p342 = por %p340, %p341
      %p343 = scmp.ne.s32.totalorder %s334, %s335
      %p344 = scmp.eq.s32.totalorder %s35, 0
      %p345 = por %p343, %p344
      %p346 = scmp.ne.s32.totalorder %s334, %s335
      %p347 = scmp.eq.s32.totalorder %s36, 1
      %p348 = por %p346, %p347
      %p350 = scmp.ne.s32.totalorder %s335, %s349
      %p351 = scmp.eq.s32.totalorder %s36, 0
      %p352 = por %p350, %p351
      %s354 = sadd.s32 %s353, 1
      %p357 = scmp.eq.s32.totalorder %s30, 1
      %p358 = scmp.ne.s32.totalorder %s353, %s355
      %p359 = scmp.eq.s32.totalorder %s30, 0
      %p360 = por %p358, %p359
      %p361 = scmp.ne.s32.totalorder %s353, %s355
      %p362 = scmp.eq.s32.totalorder %s35, 1
      %p363 = por %p361, %p362
      %p364 = scmp.ne.s32.totalorder %s355, %s356
      %p365 = scmp.eq.s32.totalorder %s35, 0
      %p366 = por %p364, %p365
      %p367 = scmp.ne.s32.totalorder %s355, %s356
      %p368 = scmp.eq.s32.totalorder %s36, 1
      %p369 = por %p367, %p368
      %p371 = scmp.ne.s32.totalorder %s356, %s370
      %p372 = scmp.eq.s32.totalorder %s36, 0
      %p373 = por %p371, %p372
      %s374 = ssub.s32 %s30, %s37
      %p375 = scmp.eq.s32.totalorder %s374, 0
      %s377 = sadd.s32 %s376, 1
      %s378 = scalar_select %p375, %s376, %s377
      %p381 = pneg %p375
      %p382 = scmp.eq.s32.totalorder %s30, 1
      %p383 = por %p381, %p382
      %p384 = scmp.ne.s32.totalorder %s376, %s379
      %p385 = scmp.eq.s32.totalorder %s30, 0
      %p386 = por %p384, %p385
      %p387 = scmp.ne.s32.totalorder %s376, %s379
      %p388 = scmp.eq.s32.totalorder %s35, 1
      %p389 = por %p387, %p388
      %p390 = scmp.ne.s32.totalorder %s379, %s380
      %p391 = scmp.eq.s32.totalorder %s35, 0
      %p392 = por %p390, %p391
      %p393 = scmp.ne.s32.totalorder %s379, %s380
      %p394 = scmp.eq.s32.totalorder %s36, 1
      %p395 = por %p393, %p394
      %p397 = scmp.ne.s32.totalorder %s380, %s396
      %p398 = scmp.eq.s32.totalorder %s36, 0
      %p399 = por %p397, %p398
      %p400 = scmp.le.s32.totalorder 1, %s30
      %p401 = scmp.lt.s32.totalorder %s30, 3
      %p402 = pnand %p400, %p401
      %p403 = pneg %p402
      // Predicated region
      $region9: #{tpu_custom_call.1} parent=5 // pred_check
        _
      $region10: #{tpu_custom_call.1} parent=5 // pred_check_branch
        %405 = sbr.rel (%p402) target = $region12
      $region11: #{tpu_custom_call.1} parent=5 // pred_region
        %s406 = ssub.s32 %s30, 1
        // Predicated region
        $region13: #{tpu_custom_call.1} parent=11 // pred_check
          %p407 = pneg %p51
        $region14: #{tpu_custom_call.1} parent=11 // pred_check_branch
          %409 = sbr.rel (%p407) target = $region16
        $region15: #{tpu_custom_call.1} parent=11 // pred_region
          %411 = vsyncadd [#allocation3], 0
          %s412 = sshll.u32 %s0, 4
          %s413 = int_to_ptr.hbm [resolvable:$true] %s412
          %s414 = sshll.u32 [#allocation2], 4
          %s415 = int_to_ptr.vmem [resolvable:$true] %s414
          %420 = dma.hbm_to_vmem [thread:$0]  %s413, 256, %s415, [#allocation3], 128, 128, 8
        $region16: #{tpu_custom_call.1} parent=11 // pred_fallthru
          _
        // Predicated region
        $region17: #{tpu_custom_call.1} parent=11 // pred_check
          %p421 = pneg %p72
        $region18: #{tpu_custom_call.1} parent=11 // pred_check_branch
          %423 = sbr.rel (%p421) target = $region20
        $region19: #{tpu_custom_call.1} parent=11 // pred_region
          %425 = vsyncadd [#allocation6], 0
          %s426 = sshll.u32 %s1, 4
          %s427 = int_to_ptr.hbm [resolvable:$true] %s426
          %s428 = sshll.u32 [#allocation5], 4
          %s429 = int_to_ptr.vmem [resolvable:$true] %s428
          %434 = dma.hbm_to_vmem [thread:$0]  %s427, 256, %s429, [#allocation6], 128, 128, 8
        $region20: #{tpu_custom_call.1} parent=11 // pred_fallthru
          _
        // Predicated region
        $region21: #{tpu_custom_call.1} parent=11 // pred_check
          %p435 = pneg %p93
        $region22: #{tpu_custom_call.1} parent=11 // pred_check_branch
          %437 = sbr.rel (%p435) target = $region24
        $region23: #{tpu_custom_call.1} parent=11 // pred_region
          %439 = vsyncadd [#allocation6], 0
          %s440 = sshll.u32 %s2, 4
          %s441 = int_to_ptr.hbm [resolvable:$true] %s440
          %s442 = sshll.u32 [#allocation7], 4
          %s443 = int_to_ptr.vmem [resolvable:$true] %s442
          %448 = dma.hbm_to_vmem [thread:$0]  %s441, 2048, %s443, [#allocation6], 128, 128, 8
        $region24: #{tpu_custom_call.1} parent=11 // pred_fallthru
          _
        // Predicated region
        $region25: #{tpu_custom_call.1} parent=11 // pred_check
          %p449 = pneg %p114
        $region26: #{tpu_custom_call.1} parent=11 // pred_check_branch
          %451 = sbr.rel (%p449) target = $region28
        $region27: #{tpu_custom_call.1} parent=11 // pred_region
          _
        $region28: #{tpu_custom_call.1} parent=11 // pred_fallthru
          _
        // Predicated region
        $region29: #{tpu_custom_call.1} parent=11 // pred_check
          %p452 = pneg %p135
        $region30: #{tpu_custom_call.1} parent=11 // pred_check_branch
          %454 = sbr.rel (%p452) target = $region32
        $region31: #{tpu_custom_call.1} parent=11 // pred_region
          %456 = vsyncadd [#allocation9], 0
          %s457 = sshll.u32 %s4, 4
          %s458 = int_to_ptr.hbm [resolvable:$true] %s457
          %s459 = sshll.u32 [#allocation8], 4
          %s460 = int_to_ptr.vmem [resolvable:$true] %s459
          %465 = dma.hbm_to_vmem [thread:$0]  %s458, 1024, %s460, [#allocation9], 64, 64, 4
        $region32: #{tpu_custom_call.1} parent=11 // pred_fallthru
          _
        // Predicated region
        $region33: #{tpu_custom_call.1} parent=11 // pred_check
          %p466 = pneg %p156
        $region34: #{tpu_custom_call.1} parent=11 // pred_check_branch
          %468 = sbr.rel (%p466) target = $region36
        $region35: #{tpu_custom_call.1} parent=11 // pred_region
          %470 = vsyncadd [#allocation9], 0
          %s472 = sshll.u32 %s5, 4
          %s473 = int_to_ptr.hbm [resolvable:$true] %s472
          %s474 = sshll.u32 [#allocation10], 4
          %s475 = int_to_ptr.vmem [resolvable:$true] %s474
          %477 = dma.hbm_to_vmem [thread:$0]  %s473, 16, %s475, [#allocation9]
        $region36: #{tpu_custom_call.1} parent=11 // pred_fallthru
          _
        // Predicated region
        $region37: #{tpu_custom_call.1} parent=11 // pred_check
          %p478 = pneg %p177
        $region38: #{tpu_custom_call.1} parent=11 // pred_check_branch
          %480 = sbr.rel (%p478) target = $region40
        $region39: #{tpu_custom_call.1} parent=11 // pred_region
          %482 = vsyncadd [#allocation12], 0
          %s483 = sshll.u32 %s6, 4
          %s484 = int_to_ptr.hbm [resolvable:$true] %s483
          %s485 = sshll.u32 [#allocation11], 4
          %s486 = int_to_ptr.vmem [resolvable:$true] %s485
          %491 = dma.hbm_to_vmem [thread:$0]  %s484, 1024, %s486, [#allocation12], 64, 64, 4
        $region40: #{tpu_custom_call.1} parent=11 // pred_fallthru
          _
        // Predicated region
        $region41: #{tpu_custom_call.1} parent=11 // pred_check
          %p492 = pneg %p198
        $region42: #{tpu_custom_call.1} parent=11 // pred_check_branch
          %494 = sbr.rel (%p492) target = $region44
        $region43: #{tpu_custom_call.1} parent=11 // pred_region
          _
        $region44: #{tpu_custom_call.1} parent=11 // pred_fallthru
          _
        // Predicated region
        $region45: #{tpu_custom_call.1} parent=11 // pred_check
          %p495 = pneg %p219
        $region46: #{tpu_custom_call.1} parent=11 // pred_check_branch
          %497 = sbr.rel (%p495) target = $region48
        $region47: #{tpu_custom_call.1} parent=11 // pred_region
          %499 = vsyncadd [#allocation12], 0
          %s500 = sshll.u32 %s8, 4
          %s501 = int_to_ptr.hbm [resolvable:$true] %s500
          %s502 = sshll.u32 [#allocation13], 4
          %s503 = int_to_ptr.vmem [resolvable:$true] %s502
          %508 = dma.hbm_to_vmem [thread:$0]  %s501, 2048, %s503, [#allocation12], 128, 128, 8
        $region48: #{tpu_custom_call.1} parent=11 // pred_fallthru
          _
        // Predicated region
        $region49: #{tpu_custom_call.1} parent=11 // pred_check
          %p509 = pneg %p240
        $region50: #{tpu_custom_call.1} parent=11 // pred_check_branch
          %511 = sbr.rel (%p509) target = $region52
        $region51: #{tpu_custom_call.1} parent=11 // pred_region
          _
        $region52: #{tpu_custom_call.1} parent=11 // pred_fallthru
          _
        // Predicated region
        $region53: #{tpu_custom_call.1} parent=11 // pred_check
          %p512 = pneg %p261
        $region54: #{tpu_custom_call.1} parent=11 // pred_check_branch
          %514 = sbr.rel (%p512) target = $region56
        $region55: #{tpu_custom_call.1} parent=11 // pred_region
          %516 = vsyncadd [#allocation15], 0
          %s517 = sshll.u32 %s10, 4
          %s518 = int_to_ptr.hbm [resolvable:$true] %s517
          %s519 = sshll.u32 [#allocation14], 4
          %s520 = int_to_ptr.vmem [resolvable:$true] %s519
          %525 = dma.hbm_to_vmem [thread:$0]  %s518, 2048, %s520, [#allocation15], 64, 64, 4
        $region56: #{tpu_custom_call.1} parent=11 // pred_fallthru
          _
        // Predicated region
        $region57: #{tpu_custom_call.1} parent=11 // pred_check
          %p526 = pneg %p282
        $region58: #{tpu_custom_call.1} parent=11 // pred_check_branch
          %528 = sbr.rel (%p526) target = $region60
        $region59: #{tpu_custom_call.1} parent=11 // pred_region
          _
        $region60: #{tpu_custom_call.1} parent=11 // pred_fallthru
          _
        // Predicated region
        $region61: #{tpu_custom_call.1} parent=11 // pred_check
          %p529 = pneg %p303
        $region62: #{tpu_custom_call.1} parent=11 // pred_check_branch
          %531 = sbr.rel (%p529) target = $region64
        $region63: #{tpu_custom_call.1} parent=11 // pred_region
          _
        $region64: #{tpu_custom_call.1} parent=11 // pred_fallthru
          _
        // Predicated region
        $region65: #{tpu_custom_call.1} parent=11 // pred_check
          %p532 = pneg %p324
        $region66: #{tpu_custom_call.1} parent=11 // pred_check_branch
          %534 = sbr.rel (%p532) target = $region68
        $region67: #{tpu_custom_call.1} parent=11 // pred_region
          _
        $region68: #{tpu_custom_call.1} parent=11 // pred_fallthru
          _
        // Predicated region
        $region69: #{tpu_custom_call.1} parent=11 // pred_check
          %p535 = pneg %p345
        $region70: #{tpu_custom_call.1} parent=11 // pred_check_branch
          %537 = sbr.rel (%p535) target = $region72
        $region71: #{tpu_custom_call.1} parent=11 // pred_region
          _
        $region72: #{tpu_custom_call.1} parent=11 // pred_fallthru
          _
        // Predicated region
        $region73: #{tpu_custom_call.1} parent=11 // pred_check
          %p538 = pneg %p366
        $region74: #{tpu_custom_call.1} parent=11 // pred_check_branch
          %540 = sbr.rel (%p538) target = $region76
        $region75: #{tpu_custom_call.1} parent=11 // pred_region
          _
        $region76: #{tpu_custom_call.1} parent=11 // pred_fallthru
          _
      $region12: #{tpu_custom_call.1} parent=5 // pred_fallthru
        _
      %p541 = scmp.lt.s32.totalorder %s30, 2
      // Predicated region
      $region77: #{tpu_custom_call.1} parent=5 // pred_check
        %p542 = pneg %p541
      $region78: #{tpu_custom_call.1} parent=5 // pred_check_branch
        %544 = sbr.rel (%p542) target = $region80
      $region79: #{tpu_custom_call.1} parent=5 // pred_region
        _
      $region80: #{tpu_custom_call.1} parent=5 // pred_fallthru
        _
      %p545 = scmp.le.s32.totalorder 1, %s30
      %p546 = scmp.lt.s32.totalorder %s30, 3
      %p547 = pnand %p545, %p546
      %p548 = pneg %p547
      // Predicated region
      $region81: #{tpu_custom_call.1} parent=5 // pred_check
        _
      $region82: #{tpu_custom_call.1} parent=5 // pred_check_branch
        %550 = sbr.rel (%p547) target = $region84
      $region83: #{tpu_custom_call.1} parent=5 // pred_region
        %s551 = ssub.s32 %s30, 1
        // Predicated region
        $region85: #{tpu_custom_call.1} parent=83 // pred_check
          %p552 = pneg %p51
        $region86: #{tpu_custom_call.1} parent=83 // pred_check_branch
          %554 = sbr.rel (%p552) target = $region88
        $region87: #{tpu_custom_call.1} parent=83 // pred_region
          %556 = dma.done [#allocation3], 256
        $region88: #{tpu_custom_call.1} parent=83 // pred_fallthru
          _
        // Predicated region
        $region89: #{tpu_custom_call.1} parent=83 // pred_check
          %p557 = pneg %p72
        $region90: #{tpu_custom_call.1} parent=83 // pred_check_branch
          %559 = sbr.rel (%p557) target = $region92
        $region91: #{tpu_custom_call.1} parent=83 // pred_region
          %561 = dma.done [#allocation6], 256
        $region92: #{tpu_custom_call.1} parent=83 // pred_fallthru
          _
        // Predicated region
        $region93: #{tpu_custom_call.1} parent=83 // pred_check
          %p562 = pneg %p93
        $region94: #{tpu_custom_call.1} parent=83 // pred_check_branch
          %564 = sbr.rel (%p562) target = $region96
        $region95: #{tpu_custom_call.1} parent=83 // pred_region
          %566 = dma.done [#allocation6], 2048
        $region96: #{tpu_custom_call.1} parent=83 // pred_fallthru
          _
        // Predicated region
        $region97: #{tpu_custom_call.1} parent=83 // pred_check
          %p567 = pneg %p135
        $region98: #{tpu_custom_call.1} parent=83 // pred_check_branch
          %569 = sbr.rel (%p567) target = $region100
        $region99: #{tpu_custom_call.1} parent=83 // pred_region
          %571 = dma.done [#allocation9], 1024
        $region100: #{tpu_custom_call.1} parent=83 // pred_fallthru
          _
        // Predicated region
        $region101: #{tpu_custom_call.1} parent=83 // pred_check
          %p572 = pneg %p156
        $region102: #{tpu_custom_call.1} parent=83 // pred_check_branch
          %574 = sbr.rel (%p572) target = $region104
        $region103: #{tpu_custom_call.1} parent=83 // pred_region
          %576 = dma.done [#allocation9], 16
        $region104: #{tpu_custom_call.1} parent=83 // pred_fallthru
          _
        // Predicated region
        $region105: #{tpu_custom_call.1} parent=83 // pred_check
          %p577 = pneg %p177
        $region106: #{tpu_custom_call.1} parent=83 // pred_check_branch
          %579 = sbr.rel (%p577) target = $region108
        $region107: #{tpu_custom_call.1} parent=83 // pred_region
          %581 = dma.done [#allocation12], 1024
        $region108: #{tpu_custom_call.1} parent=83 // pred_fallthru
          _
        // Predicated region
        $region109: #{tpu_custom_call.1} parent=83 // pred_check
          %p582 = pneg %p219
        $region110: #{tpu_custom_call.1} parent=83 // pred_check_branch
          %584 = sbr.rel (%p582) target = $region112
        $region111: #{tpu_custom_call.1} parent=83 // pred_region
          %586 = dma.done [#allocation12], 2048
        $region112: #{tpu_custom_call.1} parent=83 // pred_fallthru
          _
        // Predicated region
        $region113: #{tpu_custom_call.1} parent=83 // pred_check
          %p587 = pneg %p261
        $region114: #{tpu_custom_call.1} parent=83 // pred_check_branch
          %589 = sbr.rel (%p587) target = $region116
        $region115: #{tpu_custom_call.1} parent=83 // pred_region
          %591 = dma.done [#allocation15], 2048
        $region116: #{tpu_custom_call.1} parent=83 // pred_fallthru
          _
        %p592 = pneg %p51
        %p593 = pneg %p48
        %p594 = pneg %p72
        %p595 = pneg %p69
        %p596 = pneg %p93
        %p597 = pneg %p90
        %p598 = pneg %p114
        %p599 = pneg %p111
        %p600 = pneg %p135
        %p601 = pneg %p132
        %p602 = pneg %p156
        %p603 = pneg %p153
        %p604 = pneg %p177
        %p605 = pneg %p174
        %p606 = pneg %p198
        %p607 = pneg %p195
        %p608 = pneg %p219
        %p609 = pneg %p216
        %p610 = pneg %p240
        %p611 = pneg %p237
        %p612 = pneg %p261
        %p613 = pneg %p258
        %p614 = pneg %p282
        %p615 = pneg %p279
        %p616 = pneg %p303
        %p617 = pneg %p300
        %p618 = pneg %p324
        %p619 = pneg %p321
        %p620 = pneg %p345
        %p621 = pneg %p342
        %p622 = pneg %p366
        %p623 = pneg %p363
        %p624 = pneg %p392
        %p625 = pneg %p389
        %s626 = sand.u32 %s379, 1
        %s627 = scalar_lea.sflag [#allocation4], %s626
        %s628 = sand.u32 %s379, 1
        %s629 = smul.addr %s628, 16
        %s630 = scalar_lea.vmem [#allocation16], %s629
        %s631 = smul.u32 2, %s35
        %p633 = scmp.eq.s32.totalorder %s35, 0
        %v634 = vld [vmem:[#allocation2] sm:$0xff]
        %v635 = vld [vmem:[#allocation2 + $0x8] sm:$0xff]
        %v636 = vld [vmem:[#allocation5] sm:$0xff]
        %v637 = vld [vmem:[#allocation5 + $0x8] sm:$0xff]
        %s638 = scalar_select %p633, 1, 0
        %v639 = vstv %s638
        %vm640 = vcmp.eq.s32.totalorder %v639, 1
        %v641 = vsel %vm640, %v634, %v636
        %v642 = vsel %vm640, %v635, %v637
        %v643 = vsel %vm640, %v636, %v634
        %v644 = vsel %vm640, %v637, %v635
        %v645 = vpack.c.bf16 %v642, %v641
        %v646 = vpack.c.bf16 %v644, %v643
        %v647 = vld [vmem:[#allocation7] sm:$0xff]
        %v648 = vld [vmem:[#allocation7 + $0x8] sm:$0xff]
        %v649 = vld [vmem:[#allocation7 + $0x10] sm:$0xff]
        %v650 = vld [vmem:[#allocation7 + $0x18] sm:$0xff]
        %v651 = vld [vmem:[#allocation7 + $0x20] sm:$0xff]
        %v652 = vld [vmem:[#allocation7 + $0x28] sm:$0xff]
        %v653 = vld [vmem:[#allocation7 + $0x30] sm:$0xff]
        %v654 = vld [vmem:[#allocation7 + $0x38] sm:$0xff]
        %v655 = vld [vmem:[#allocation7 + $0x40] sm:$0xff]
        %v656 = vld [vmem:[#allocation7 + $0x48] sm:$0xff]
        %v657 = vld [vmem:[#allocation7 + $0x50] sm:$0xff]
        %v658 = vld [vmem:[#allocation7 + $0x58] sm:$0xff]
        %v659 = vld [vmem:[#allocation7 + $0x60] sm:$0xff]
        %v660 = vld [vmem:[#allocation7 + $0x68] sm:$0xff]
        %v661 = vld [vmem:[#allocation7 + $0x70] sm:$0xff]
        %v662 = vld [vmem:[#allocation7 + $0x78] sm:$0xff]
        %v663 = vld [vmem:[%s3] sm:$0x3]
        %v665 = vperm.slane %v663, 0
        %v666 = vperm.slane %v663, 1
        %v685 = vunpack.c.l.b16 %v647
        %v686 = vunpack.c.h.b16 %v647
        %v687 = vunpack.c.l.b16 %v648
        %v688 = vunpack.c.h.b16 %v648
        %v689 = vunpack.c.l.b16 %v649
        %v690 = vunpack.c.h.b16 %v649
        %v691 = vunpack.c.l.b16 %v650
        %v692 = vunpack.c.h.b16 %v650
        %v693 = vunpack.c.l.b16 %v651
        %v694 = vunpack.c.h.b16 %v651
        %v695 = vunpack.c.l.b16 %v652
        %v696 = vunpack.c.h.b16 %v652
        %v697 = vunpack.c.l.b16 %v653
        %v698 = vunpack.c.h.b16 %v653
        %v699 = vunpack.c.l.b16 %v654
        %v700 = vunpack.c.h.b16 %v654
        %v701 = vunpack.c.l.b16 %v655
        %v702 = vunpack.c.h.b16 %v655
        %v703 = vunpack.c.l.b16 %v656
        %v704 = vunpack.c.h.b16 %v656
        %v705 = vunpack.c.l.b16 %v657
        %v706 = vunpack.c.h.b16 %v657
        %v707 = vunpack.c.l.b16 %v658
        %v708 = vunpack.c.h.b16 %v658
        %v709 = vunpack.c.l.b16 %v659
        %v710 = vunpack.c.h.b16 %v659
        %v711 = vunpack.c.l.b16 %v660
        %v712 = vunpack.c.h.b16 %v660
        %v713 = vunpack.c.l.b16 %v661
        %v714 = vunpack.c.h.b16 %v661
        %v715 = vunpack.c.l.b16 %v662
        %v716 = vunpack.c.h.b16 %v662
        %v717 = vpack.c.b16 %v687, %v685
        %v718 = vpack.c.b16 %v688, %v686
        %v719 = vpack.c.b16 %v691, %v689
        %v720 = vpack.c.b16 %v692, %v690
        %v721 = vpack.c.b16 %v695, %v693
        %v722 = vpack.c.b16 %v696, %v694
        %v723 = vpack.c.b16 %v699, %v697
        %v724 = vpack.c.b16 %v700, %v698
        %v725 = vpack.c.b16 %v703, %v701
        %v726 = vpack.c.b16 %v704, %v702
        %v727 = vpack.c.b16 %v707, %v705
        %v728 = vpack.c.b16 %v708, %v706
        %v729 = vpack.c.b16 %v711, %v709
        %v730 = vpack.c.b16 %v712, %v710
        %v731 = vpack.c.b16 %v715, %v713
        %v732 = vpack.c.b16 %v716, %v714
        %749 = vmatpush.bf16.msra.mxu0 %v731
        %750 = vmatpush.bf16.msra.mxu0 %v729
        %751 = vmatpush.bf16.msra.mxu0 %v727
        %752 = vmatpush.bf16.msra.mxu0 %v725
        %753 = vmatpush.bf16.msra.mxu0 %v723
        %754 = vmatpush.bf16.msra.mxu0 %v721
        %755 = vmatpush.bf16.msra.mxu0 %v719
        %756 = vmatpush.bf16.msra.mxu0 %v717
        %757 = vmatmul.bf16.gmra.mxu0 %v645
        %v758 = vpop.f32.mrf.mxu0
        %v759 = vadd.f32 %v665, %v758
        %v760 = vpop.f32.mrf.mxu0
        %v761 = vadd.f32 %v665, %v760
        %762 = vdwg.mxu0
        %763 = vmatpush.bf16.msra.mxu0 %v732
        %764 = vmatpush.bf16.msra.mxu0 %v730
        %765 = vmatpush.bf16.msra.mxu0 %v728
        %766 = vmatpush.bf16.msra.mxu0 %v726
        %767 = vmatpush.bf16.msra.mxu0 %v724
        %768 = vmatpush.bf16.msra.mxu0 %v722
        %769 = vmatpush.bf16.msra.mxu0 %v720
        %770 = vmatpush.bf16.msra.mxu0 %v718
        %771 = vmatmul.bf16.gmra.mxu0 %v645
        %v772 = vpop.f32.mrf.mxu0
        %v773 = vadd.f32 %v666, %v772
        %v774 = vpop.f32.mrf.mxu0
        %v775 = vadd.f32 %v666, %v774
        %776 = vdwg.mxu0
        %v777 = vld [vmem:[#allocation8] sm:$0xf]
        %v778 = vld [vmem:[#allocation8 + $0x4] sm:$0xf]
        %v779 = vld [vmem:[#allocation8 + $0x8] sm:$0xf]
        %v780 = vld [vmem:[#allocation8 + $0xc] sm:$0xf]
        %v781 = vld [vmem:[#allocation8 + $0x10] sm:$0xf]
        %v782 = vld [vmem:[#allocation8 + $0x14] sm:$0xf]
        %v783 = vld [vmem:[#allocation8 + $0x18] sm:$0xf]
        %v784 = vld [vmem:[#allocation8 + $0x1c] sm:$0xf]
        %v785 = vld [vmem:[#allocation8 + $0x20] sm:$0xf]
        %v786 = vld [vmem:[#allocation8 + $0x24] sm:$0xf]
        %v787 = vld [vmem:[#allocation8 + $0x28] sm:$0xf]
        %v788 = vld [vmem:[#allocation8 + $0x2c] sm:$0xf]
        %v789 = vld [vmem:[#allocation8 + $0x30] sm:$0xf]
        %v790 = vld [vmem:[#allocation8 + $0x34] sm:$0xf]
        %v791 = vld [vmem:[#allocation8 + $0x38] sm:$0xf]
        %v792 = vld [vmem:[#allocation8 + $0x3c] sm:$0xf]
        %v793 = vld [vmem:[#allocation10] sm:$0x1]
        %v795 = vperm.slane %v793, 0
        %v813 = vunpack.c.l.b16 %v777
        %v814 = vunpack.c.l.b16 %v778
        %v815 = vunpack.c.l.b16 %v779
        %v816 = vunpack.c.l.b16 %v780
        %v817 = vunpack.c.l.b16 %v781
        %v818 = vunpack.c.l.b16 %v782
        %v819 = vunpack.c.l.b16 %v783
        %v820 = vunpack.c.l.b16 %v784
        %v821 = vunpack.c.l.b16 %v785
        %v822 = vunpack.c.l.b16 %v786
        %v823 = vunpack.c.l.b16 %v787
        %v824 = vunpack.c.l.b16 %v788
        %v825 = vunpack.c.l.b16 %v789
        %v826 = vunpack.c.l.b16 %v790
        %v827 = vunpack.c.l.b16 %v791
        %v828 = vunpack.c.l.b16 %v792
        %v829 = vpack.c.b16 %v814, %v813
        %v830 = vpack.c.b16 %v816, %v815
        %v831 = vpack.c.b16 %v818, %v817
        %v832 = vpack.c.b16 %v820, %v819
        %v833 = vpack.c.b16 %v822, %v821
        %v834 = vpack.c.b16 %v824, %v823
        %v835 = vpack.c.b16 %v826, %v825
        %v836 = vpack.c.b16 %v828, %v827
        %845 = vmatpush.bf16.msra.mxu0 %v836
        %846 = vmatpush.bf16.msra.mxu0 %v835
        %847 = vmatpush.bf16.msra.mxu0 %v834
        %848 = vmatpush.bf16.msra.mxu0 %v833
        %849 = vmatpush.bf16.msra.mxu0 %v832
        %850 = vmatpush.bf16.msra.mxu0 %v831
        %851 = vmatpush.bf16.msra.mxu0 %v830
        %852 = vmatpush.bf16.msra.mxu0 %v829
        %853 = vmatmul.bf16.gmra.mxu0 %v646
        %v854 = vpop.f32.mrf.mxu0
        %v855 = vadd.f32 %v795, %v854
        %v856 = vpop.f32.mrf.mxu0
        %v857 = vadd.f32 %v795, %v856
        %858 = vdwg.mxu0
        %v859 = vmul.f32 %v759, 0.17677669
        %v860 = vmul.f32 %v761, 0.17677669
        %863 = vrot.lane.b32.xlu0 %v859, 96
        %v864 = vpop.permute.xlu0 %863
        %865 = vrot.lane.b32.xlu0 %v860, 96
        %v866 = vpop.permute.xlu0 %865
        %869 = vrot.lane.b32.xlu0 %v859, 64
        %v870 = vpop.permute.xlu0 %869
        %871 = vrot.lane.b32.xlu0 %v860, 64
        %v872 = vpop.permute.xlu0 %871
        %875 = vrot.lane.b32.xlu0 %v859, 32
        %v876 = vpop.permute.xlu0 %875
        %877 = vrot.lane.b32.xlu0 %v860, 32
        %v878 = vpop.permute.xlu0 %877
        %v881 = vpack.c.bf16 %v859, %v859
        %v882 = vpack.c.bf16 %v860, %v860
        %v883 = vpack.c.bf16 %v864, %v864
        %v884 = vpack.c.bf16 %v866, %v866
        %v885 = vpack.c.bf16 %v870, %v870
        %v886 = vpack.c.bf16 %v872, %v872
        %v887 = vpack.c.bf16 %v876, %v876
        %v888 = vpack.c.bf16 %v878, %v878
        %891 = vrot.lane.b32.xlu0 %v855, 96
        %v892 = vpop.permute.xlu0 %891
        %893 = vrot.lane.b32.xlu0 %v857, 96
        %v894 = vpop.permute.xlu0 %893
        %897 = vrot.lane.b32.xlu0 %v855, 64
        %v898 = vpop.permute.xlu0 %897
        %899 = vrot.lane.b32.xlu0 %v857, 64
        %v900 = vpop.permute.xlu0 %899
        %903 = vrot.lane.b32.xlu0 %v855, 32
        %v904 = vpop.permute.xlu0 %903
        %905 = vrot.lane.b32.xlu0 %v857, 32
        %v906 = vpop.permute.xlu0 %905
        %v909 = vpack.c.bf16 %v855, %v855
        %v910 = vpack.c.bf16 %v857, %v857
        %v911 = vpack.c.bf16 %v892, %v892
        %v912 = vpack.c.bf16 %v894, %v894
        %v913 = vpack.c.bf16 %v898, %v898
        %v914 = vpack.c.bf16 %v900, %v900
        %v915 = vpack.c.bf16 %v904, %v904
        %v916 = vpack.c.bf16 %v906, %v906
        %919 = vrot.lane.b32.xlu0 %v773, 96
        %v920 = vpop.permute.xlu0 %919
        %921 = vrot.lane.b32.xlu0 %v775, 96
        %v922 = vpop.permute.xlu0 %921
        %925 = vrot.lane.b32.xlu0 %v773, 64
        %v926 = vpop.permute.xlu0 %925
        %927 = vrot.lane.b32.xlu0 %v775, 64
        %v928 = vpop.permute.xlu0 %927
        %931 = vrot.lane.b32.xlu0 %v773, 32
        %v932 = vpop.permute.xlu0 %931
        %933 = vrot.lane.b32.xlu0 %v775, 32
        %v934 = vpop.permute.xlu0 %933
        %v937 = vpack.c.bf16 %v773, %v773
        %v938 = vpack.c.bf16 %v775, %v775
        %v939 = vpack.c.bf16 %v920, %v920
        %v940 = vpack.c.bf16 %v922, %v922
        %v941 = vpack.c.bf16 %v926, %v926
        %v942 = vpack.c.bf16 %v928, %v928
        %v943 = vpack.c.bf16 %v932, %v932
        %v944 = vpack.c.bf16 %v934, %v934
        %vm945 = vcmask 261120
        %v947 = vsel %vm945, %v881, 0
        %v950 = vsel %vm945, %v909, 0
        %952 = vmatpush.bf16.xpose.msra.mxu0 0
        %953 = vmatpush.bf16.xpose.msra.mxu0 0
        %954 = vmatpush.bf16.xpose.msra.mxu0 0
        %955 = vmatpush.bf16.xpose.msra.mxu0 0
        %956 = vmatpush.bf16.xpose.msra.mxu0 0
        %957 = vmatpush.bf16.xpose.msra.mxu0 0
        %958 = vmatpush.bf16.xpose.msra.mxu0 0
        %959 = vmatpush.bf16.xpose.msra.mxu0 %v950
        %960 = vmatmul.bf16.gmra.mxu0 %v947
        %v961 = vpop.f32.mrf.mxu0
        %v962 = vadd.f32 0.0, %v961
        %v963 = vpop.f32.mrf.mxu0
        %964 = vdwg.mxu0
        %v966 = vsel %vm945, %v882, 0
        %v969 = vsel %vm945, %v910, 0
        %971 = vmatpush.bf16.xpose.msra.mxu0 0
        %972 = vmatpush.bf16.xpose.msra.mxu0 0
        %973 = vmatpush.bf16.xpose.msra.mxu0 0
        %974 = vmatpush.bf16.xpose.msra.mxu0 0
        %975 = vmatpush.bf16.xpose.msra.mxu0 0
        %976 = vmatpush.bf16.xpose.msra.mxu0 0
        %977 = vmatpush.bf16.xpose.msra.mxu0 0
        %978 = vmatpush.bf16.xpose.msra.mxu0 %v969
        %979 = vmatmul.bf16.gmra.mxu0 %v966
        %v980 = vpop.f32.mrf.mxu0
        %v981 = vadd.f32 0.0, %v980
        %v982 = vpop.f32.mrf.mxu0
        %983 = vdwg.mxu0
        %v985 = vsel %vm945, %v883, 0
        %v988 = vsel %vm945, %v911, 0
        %990 = vmatpush.bf16.xpose.msra.mxu0 0
        %991 = vmatpush.bf16.xpose.msra.mxu0 0
        %992 = vmatpush.bf16.xpose.msra.mxu0 0
        %993 = vmatpush.bf16.xpose.msra.mxu0 0
        %994 = vmatpush.bf16.xpose.msra.mxu0 0
        %995 = vmatpush.bf16.xpose.msra.mxu0 0
        %996 = vmatpush.bf16.xpose.msra.mxu0 0
        %997 = vmatpush.bf16.xpose.msra.mxu0 %v988
        %998 = vmatmul.bf16.gmra.mxu0 %v985
        %v999 = vpop.f32.mrf.mxu0
        %v1000 = vadd.f32 0.0, %v999
        %v1001 = vpop.f32.mrf.mxu0
        %1002 = vdwg.mxu0
        %v1004 = vsel %vm945, %v884, 0
        %v1007 = vsel %vm945, %v912, 0
        %1009 = vmatpush.bf16.xpose.msra.mxu0 0
        %1010 = vmatpush.bf16.xpose.msra.mxu0 0
        %1011 = vmatpush.bf16.xpose.msra.mxu0 0
        %1012 = vmatpush.bf16.xpose.msra.mxu0 0
        %1013 = vmatpush.bf16.xpose.msra.mxu0 0
        %1014 = vmatpush.bf16.xpose.msra.mxu0 0
        %1015 = vmatpush.bf16.xpose.msra.mxu0 0
        %1016 = vmatpush.bf16.xpose.msra.mxu0 %v1007
        %1017 = vmatmul.bf16.gmra.mxu0 %v1004
        %v1018 = vpop.f32.mrf.mxu0
        %v1019 = vadd.f32 0.0, %v1018
        %v1020 = vpop.f32.mrf.mxu0
        %1021 = vdwg.mxu0
        %v1023 = vsel %vm945, %v885, 0
        %v1026 = vsel %vm945, %v913, 0
        %1028 = vmatpush.bf16.xpose.msra.mxu0 0
        %1029 = vmatpush.bf16.xpose.msra.mxu0 0
        %1030 = vmatpush.bf16.xpose.msra.mxu0 0
        %1031 = vmatpush.bf16.xpose.msra.mxu0 0
        %1032 = vmatpush.bf16.xpose.msra.mxu0 0
        %1033 = vmatpush.bf16.xpose.msra.mxu0 0
        %1034 = vmatpush.bf16.xpose.msra.mxu0 0
        %1035 = vmatpush.bf16.xpose.msra.mxu0 %v1026
        %1036 = vmatmul.bf16.gmra.mxu0 %v1023
        %v1037 = vpop.f32.mrf.mxu0
        %v1038 = vadd.f32 0.0, %v1037
        %v1039 = vpop.f32.mrf.mxu0
        %1040 = vdwg.mxu0
        %v1042 = vsel %vm945, %v886, 0
        %v1045 = vsel %vm945, %v914, 0
        %1047 = vmatpush.bf16.xpose.msra.mxu0 0
        %1048 = vmatpush.bf16.xpose.msra.mxu0 0
        %1049 = vmatpush.bf16.xpose.msra.mxu0 0
        %1050 = vmatpush.bf16.xpose.msra.mxu0 0
        %1051 = vmatpush.bf16.xpose.msra.mxu0 0
        %1052 = vmatpush.bf16.xpose.msra.mxu0 0
        %1053 = vmatpush.bf16.xpose.msra.mxu0 0
        %1054 = vmatpush.bf16.xpose.msra.mxu0 %v1045
        %1055 = vmatmul.bf16.gmra.mxu0 %v1042
        %v1056 = vpop.f32.mrf.mxu0
        %v1057 = vadd.f32 0.0, %v1056
        %v1058 = vpop.f32.mrf.mxu0
        %1059 = vdwg.mxu0
        %v1061 = vsel %vm945, %v887, 0
        %v1064 = vsel %vm945, %v915, 0
        %1066 = vmatpush.bf16.xpose.msra.mxu0 0
        %1067 = vmatpush.bf16.xpose.msra.mxu0 0
        %1068 = vmatpush.bf16.xpose.msra.mxu0 0
        %1069 = vmatpush.bf16.xpose.msra.mxu0 0
        %1070 = vmatpush.bf16.xpose.msra.mxu0 0
        %1071 = vmatpush.bf16.xpose.msra.mxu0 0
        %1072 = vmatpush.bf16.xpose.msra.mxu0 0
        %1073 = vmatpush.bf16.xpose.msra.mxu0 %v1064
        %1074 = vmatmul.bf16.gmra.mxu0 %v1061
        %v1075 = vpop.f32.mrf.mxu0
        %v1076 = vadd.f32 0.0, %v1075
        %v1077 = vpop.f32.mrf.mxu0
        %1078 = vdwg.mxu0
        %v1080 = vsel %vm945, %v888, 0
        %v1083 = vsel %vm945, %v916, 0
        %1085 = vmatpush.bf16.xpose.msra.mxu0 0
        %1086 = vmatpush.bf16.xpose.msra.mxu0 0
        %1087 = vmatpush.bf16.xpose.msra.mxu0 0
        %1088 = vmatpush.bf16.xpose.msra.mxu0 0
        %1089 = vmatpush.bf16.xpose.msra.mxu0 0
        %1090 = vmatpush.bf16.xpose.msra.mxu0 0
        %1091 = vmatpush.bf16.xpose.msra.mxu0 0
        %1092 = vmatpush.bf16.xpose.msra.mxu0 %v1083
        %1093 = vmatmul.bf16.gmra.mxu0 %v1080
        %v1094 = vpop.f32.mrf.mxu0
        %v1095 = vadd.f32 0.0, %v1094
        %v1096 = vpop.f32.mrf.mxu0
        %1097 = vdwg.mxu0
        %vm1098 = vcmask 64512
        %v1099 = vsel %vm1098, %v962, -inf
        %1100 = vmax.xlane.f32.xlu0 %v1099
        %v1101 = vpop.xlane.xlu0 %1100
        %v1102 = vsel %vm1098, %v981, -inf
        %1103 = vmax.xlane.f32.xlu0 %v1102
        %v1104 = vpop.xlane.xlu0 %1103
        %v1105 = vsel %vm1098, %v1000, -inf
        %1106 = vmax.xlane.f32.xlu0 %v1105
        %v1107 = vpop.xlane.xlu0 %1106
        %v1108 = vsel %vm1098, %v1019, -inf
        %1109 = vmax.xlane.f32.xlu0 %v1108
        %v1110 = vpop.xlane.xlu0 %1109
        %v1111 = vsel %vm1098, %v1038, -inf
        %1112 = vmax.xlane.f32.xlu0 %v1111
        %v1113 = vpop.xlane.xlu0 %1112
        %v1114 = vsel %vm1098, %v1057, -inf
        %1115 = vmax.xlane.f32.xlu0 %v1114
        %v1116 = vpop.xlane.xlu0 %1115
        %v1117 = vsel %vm1098, %v1076, -inf
        %1118 = vmax.xlane.f32.xlu0 %v1117
        %v1119 = vpop.xlane.xlu0 %1118
        %v1120 = vsel %vm1098, %v1095, -inf
        %1121 = vmax.xlane.f32.xlu0 %v1120
        %v1122 = vpop.xlane.xlu0 %1121
        %v1123 = vsub.f32 %v962, %v1101
        %v1124 = vsub.f32 %v981, %v1104
        %v1125 = vsub.f32 %v1000, %v1107
        %v1126 = vsub.f32 %v1019, %v1110
        %v1127 = vsub.f32 %v1038, %v1113
        %v1128 = vsub.f32 %v1057, %v1116
        %v1129 = vsub.f32 %v1076, %v1119
        %v1130 = vsub.f32 %v1095, %v1122
        %v1131 = vmul.f32 %v1123, 1.442695
        %v1132 = vpow.pop %v1131
        %v1133 = vmul.f32 %v1124, 1.442695
        %v1134 = vpow.pop %v1133
        %v1135 = vmul.f32 %v1125, 1.442695
        %v1136 = vpow.pop %v1135
        %v1137 = vmul.f32 %v1126, 1.442695
        %v1138 = vpow.pop %v1137
        %v1139 = vmul.f32 %v1127, 1.442695
        %v1140 = vpow.pop %v1139
        %v1141 = vmul.f32 %v1128, 1.442695
        %v1142 = vpow.pop %v1141
        %v1143 = vmul.f32 %v1129, 1.442695
        %v1144 = vpow.pop %v1143
        %v1145 = vmul.f32 %v1130, 1.442695
        %v1146 = vpow.pop %v1145
        %v1147 = vsel %vm1098, %v1132, 0.0
        %1148 = vadd.xlane.f32.xlu0 %v1147
        %v1149 = vpop.xlane.xlu0 %1148
        %v1150 = vsel %vm1098, %v1134, 0.0
        %1151 = vadd.xlane.f32.xlu0 %v1150
        %v1152 = vpop.xlane.xlu0 %1151
        %v1153 = vsel %vm1098, %v1136, 0.0
        %1154 = vadd.xlane.f32.xlu0 %v1153
        %v1155 = vpop.xlane.xlu0 %1154
        %v1156 = vsel %vm1098, %v1138, 0.0
        %1157 = vadd.xlane.f32.xlu0 %v1156
        %v1158 = vpop.xlane.xlu0 %1157
        %v1159 = vsel %vm1098, %v1140, 0.0
        %1160 = vadd.xlane.f32.xlu0 %v1159
        %v1161 = vpop.xlane.xlu0 %1160
        %v1162 = vsel %vm1098, %v1142, 0.0
        %1163 = vadd.xlane.f32.xlu0 %v1162
        %v1164 = vpop.xlane.xlu0 %1163
        %v1165 = vsel %vm1098, %v1144, 0.0
        %1166 = vadd.xlane.f32.xlu0 %v1165
        %v1167 = vpop.xlane.xlu0 %1166
        %v1168 = vsel %vm1098, %v1146, 0.0
        %1169 = vadd.xlane.f32.xlu0 %v1168
        %v1170 = vpop.xlane.xlu0 %1169
        %v1171 = vrcp.pop %v1149
        %v1172 = vrcp.pop %v1152
        %v1173 = vrcp.pop %v1155
        %v1174 = vrcp.pop %v1158
        %v1175 = vrcp.pop %v1161
        %v1176 = vrcp.pop %v1164
        %v1177 = vrcp.pop %v1167
        %v1178 = vrcp.pop %v1170
        %v1179 = vmul.f32 %v1132, %v1171
        %v1180 = vmul.f32 %v1134, %v1172
        %v1181 = vmul.f32 %v1136, %v1173
        %v1182 = vmul.f32 %v1138, %v1174
        %v1183 = vmul.f32 %v1140, %v1175
        %v1184 = vmul.f32 %v1142, %v1176
        %v1185 = vmul.f32 %v1144, %v1177
        %v1186 = vmul.f32 %v1146, %v1178
        %v1187 = vpack.c.bf16 %v1179, %v1179
        %v1188 = vpack.c.bf16 %v1180, %v1180
        %v1189 = vpack.c.bf16 %v1181, %v1181
        %v1190 = vpack.c.bf16 %v1182, %v1182
        %v1191 = vpack.c.bf16 %v1183, %v1183
        %v1192 = vpack.c.bf16 %v1184, %v1184
        %v1193 = vpack.c.bf16 %v1185, %v1185
        %v1194 = vpack.c.bf16 %v1186, %v1186
        %v1196 = vsel %vm1098, %v1187, 0
        %vm1198 = vcmask 1043456
        %v1200 = vsel %vm1198, %v937, 0
        %1202 = vmatpush.bf16.msra.mxu0 0
        %1203 = vmatpush.bf16.msra.mxu0 0
        %1204 = vmatpush.bf16.msra.mxu0 0
        %1205 = vmatpush.bf16.msra.mxu0 0
        %1206 = vmatpush.bf16.msra.mxu0 0
        %1207 = vmatpush.bf16.msra.mxu0 0
        %1208 = vmatpush.bf16.msra.mxu0 0
        %1209 = vmatpush.bf16.msra.mxu0 %v1200
        %1210 = vmatmul.bf16.gmra.mxu0 %v1196
        %v1211 = vpop.f32.mrf.mxu0
        %v1212 = vadd.f32 0.0, %v1211
        %v1213 = vpop.f32.mrf.mxu0
        %1214 = vdwg.mxu0
        %v1216 = vsel %vm1098, %v1188, 0
        %v1219 = vsel %vm1198, %v938, 0
        %1221 = vmatpush.bf16.msra.mxu0 0
        %1222 = vmatpush.bf16.msra.mxu0 0
        %1223 = vmatpush.bf16.msra.mxu0 0
        %1224 = vmatpush.bf16.msra.mxu0 0
        %1225 = vmatpush.bf16.msra.mxu0 0
        %1226 = vmatpush.bf16.msra.mxu0 0
        %1227 = vmatpush.bf16.msra.mxu0 0
        %1228 = vmatpush.bf16.msra.mxu0 %v1219
        %1229 = vmatmul.bf16.gmra.mxu0 %v1216
        %v1230 = vpop.f32.mrf.mxu0
        %v1231 = vadd.f32 0.0, %v1230
        %v1232 = vpop.f32.mrf.mxu0
        %1233 = vdwg.mxu0
        %v1235 = vsel %vm1098, %v1189, 0
        %v1238 = vsel %vm1198, %v939, 0
        %1240 = vmatpush.bf16.msra.mxu0 0
        %1241 = vmatpush.bf16.msra.mxu0 0
        %1242 = vmatpush.bf16.msra.mxu0 0
        %1243 = vmatpush.bf16.msra.mxu0 0
        %1244 = vmatpush.bf16.msra.mxu0 0
        %1245 = vmatpush.bf16.msra.mxu0 0
        %1246 = vmatpush.bf16.msra.mxu0 0
        %1247 = vmatpush.bf16.msra.mxu0 %v1238
        %1248 = vmatmul.bf16.gmra.mxu0 %v1235
        %v1249 = vpop.f32.mrf.mxu0
        %v1250 = vadd.f32 0.0, %v1249
        %v1251 = vpop.f32.mrf.mxu0
        %1252 = vdwg.mxu0
        %v1254 = vsel %vm1098, %v1190, 0
        %v1257 = vsel %vm1198, %v940, 0
        %1259 = vmatpush.bf16.msra.mxu0 0
        %1260 = vmatpush.bf16.msra.mxu0 0
        %1261 = vmatpush.bf16.msra.mxu0 0
        %1262 = vmatpush.bf16.msra.mxu0 0
        %1263 = vmatpush.bf16.msra.mxu0 0
        %1264 = vmatpush.bf16.msra.mxu0 0
        %1265 = vmatpush.bf16.msra.mxu0 0
        %1266 = vmatpush.bf16.msra.mxu0 %v1257
        %1267 = vmatmul.bf16.gmra.mxu0 %v1254
        %v1268 = vpop.f32.mrf.mxu0
        %v1269 = vadd.f32 0.0, %v1268
        %v1270 = vpop.f32.mrf.mxu0
        %1271 = vdwg.mxu0
        %v1273 = vsel %vm1098, %v1191, 0
        %v1276 = vsel %vm1198, %v941, 0
        %1278 = vmatpush.bf16.msra.mxu0 0
        %1279 = vmatpush.bf16.msra.mxu0 0
        %1280 = vmatpush.bf16.msra.mxu0 0
        %1281 = vmatpush.bf16.msra.mxu0 0
        %1282 = vmatpush.bf16.msra.mxu0 0
        %1283 = vmatpush.bf16.msra.mxu0 0
        %1284 = vmatpush.bf16.msra.mxu0 0
        %1285 = vmatpush.bf16.msra.mxu0 %v1276
        %1286 = vmatmul.bf16.gmra.mxu0 %v1273
        %v1287 = vpop.f32.mrf.mxu0
        %v1288 = vadd.f32 0.0, %v1287
        %v1289 = vpop.f32.mrf.mxu0
        %1290 = vdwg.mxu0
        %v1292 = vsel %vm1098, %v1192, 0
        %v1295 = vsel %vm1198, %v942, 0
        %1297 = vmatpush.bf16.msra.mxu0 0
        %1298 = vmatpush.bf16.msra.mxu0 0
        %1299 = vmatpush.bf16.msra.mxu0 0
        %1300 = vmatpush.bf16.msra.mxu0 0
        %1301 = vmatpush.bf16.msra.mxu0 0
        %1302 = vmatpush.bf16.msra.mxu0 0
        %1303 = vmatpush.bf16.msra.mxu0 0
        %1304 = vmatpush.bf16.msra.mxu0 %v1295
        %1305 = vmatmul.bf16.gmra.mxu0 %v1292
        %v1306 = vpop.f32.mrf.mxu0
        %v1307 = vadd.f32 0.0, %v1306
        %v1308 = vpop.f32.mrf.mxu0
        %1309 = vdwg.mxu0
        %v1311 = vsel %vm1098, %v1193, 0
        %v1314 = vsel %vm1198, %v943, 0
        %1316 = vmatpush.bf16.msra.mxu0 0
        %1317 = vmatpush.bf16.msra.mxu0 0
        %1318 = vmatpush.bf16.msra.mxu0 0
        %1319 = vmatpush.bf16.msra.mxu0 0
        %1320 = vmatpush.bf16.msra.mxu0 0
        %1321 = vmatpush.bf16.msra.mxu0 0
        %1322 = vmatpush.bf16.msra.mxu0 0
        %1323 = vmatpush.bf16.msra.mxu0 %v1314
        %1324 = vmatmul.bf16.gmra.mxu0 %v1311
        %v1325 = vpop.f32.mrf.mxu0
        %v1326 = vadd.f32 0.0, %v1325
        %v1327 = vpop.f32.mrf.mxu0
        %1328 = vdwg.mxu0
        %v1330 = vsel %vm1098, %v1194, 0
        %v1333 = vsel %vm1198, %v944, 0
        %1335 = vmatpush.bf16.msra.mxu0 0
        %1336 = vmatpush.bf16.msra.mxu0 0
        %1337 = vmatpush.bf16.msra.mxu0 0
        %1338 = vmatpush.bf16.msra.mxu0 0
        %1339 = vmatpush.bf16.msra.mxu0 0
        %1340 = vmatpush.bf16.msra.mxu0 0
        %1341 = vmatpush.bf16.msra.mxu0 0
        %1342 = vmatpush.bf16.msra.mxu0 %v1333
        %1343 = vmatmul.bf16.gmra.mxu0 %v1330
        %v1344 = vpop.f32.mrf.mxu0
        %v1345 = vadd.f32 0.0, %v1344
        %v1346 = vpop.f32.mrf.mxu0
        %1347 = vdwg.mxu0
        %1350 = vrot.lane.b32.xlu0 %v1250, 32
        %v1351 = vpop.permute.xlu0 %1350
        %1352 = vrot.lane.b32.xlu0 %v1269, 32
        %v1353 = vpop.permute.xlu0 %1352
        %1358 = vrot.lane.b32.xlu0 %v1288, 64
        %v1359 = vpop.permute.xlu0 %1358
        %1360 = vrot.lane.b32.xlu0 %v1307, 64
        %v1361 = vpop.permute.xlu0 %1360
        %1366 = vrot.lane.b32.xlu0 %v1326, 96
        %v1367 = vpop.permute.xlu0 %1366
        %1368 = vrot.lane.b32.xlu0 %v1345, 96
        %v1369 = vpop.permute.xlu0 %1368
        %v1372 = vsel %vm945, %v1212, %v1351
        %v1373 = vsel %vm945, %v1231, %v1353
        %vm1374 = vcmask 523264
        %v1375 = vsel %vm1374, %v1372, %v1359
        %v1376 = vsel %vm1374, %v1373, %v1361
        %vm1377 = vcmask 785408
        %v1378 = vsel %vm1377, %v1375, %v1367
        %v1379 = vsel %vm1377, %v1376, %v1369
        %v1380 = vpack.c.bf16 %v1379, %v1378
        %v1381 = vld [vmem:[#allocation11] sm:$0xf]
        %v1382 = vld [vmem:[#allocation11 + $0x4] sm:$0xf]
        %v1383 = vld [vmem:[#allocation11 + $0x8] sm:$0xf]
        %v1384 = vld [vmem:[#allocation11 + $0xc] sm:$0xf]
        %v1385 = vld [vmem:[#allocation11 + $0x10] sm:$0xf]
        %v1386 = vld [vmem:[#allocation11 + $0x14] sm:$0xf]
        %v1387 = vld [vmem:[#allocation11 + $0x18] sm:$0xf]
        %v1388 = vld [vmem:[#allocation11 + $0x1c] sm:$0xf]
        %v1389 = vld [vmem:[#allocation11 + $0x20] sm:$0xf]
        %v1390 = vld [vmem:[#allocation11 + $0x24] sm:$0xf]
        %v1391 = vld [vmem:[#allocation11 + $0x28] sm:$0xf]
        %v1392 = vld [vmem:[#allocation11 + $0x2c] sm:$0xf]
        %v1393 = vld [vmem:[#allocation11 + $0x30] sm:$0xf]
        %v1394 = vld [vmem:[#allocation11 + $0x34] sm:$0xf]
        %v1395 = vld [vmem:[#allocation11 + $0x38] sm:$0xf]
        %v1396 = vld [vmem:[#allocation11 + $0x3c] sm:$0xf]
        %v1397 = vld [vmem:[%s7] sm:$0x1]
        %v1399 = vperm.slane %v1397, 0
        %v1417 = vunpack.c.l.b16 %v1381
        %v1418 = vunpack.c.l.b16 %v1382
        %v1419 = vunpack.c.l.b16 %v1383
        %v1420 = vunpack.c.l.b16 %v1384
        %v1421 = vunpack.c.l.b16 %v1385
        %v1422 = vunpack.c.l.b16 %v1386
        %v1423 = vunpack.c.l.b16 %v1387
        %v1424 = vunpack.c.l.b16 %v1388
        %v1425 = vunpack.c.l.b16 %v1389
        %v1426 = vunpack.c.l.b16 %v1390
        %v1427 = vunpack.c.l.b16 %v1391
        %v1428 = vunpack.c.l.b16 %v1392
        %v1429 = vunpack.c.l.b16 %v1393
        %v1430 = vunpack.c.l.b16 %v1394
        %v1431 = vunpack.c.l.b16 %v1395
        %v1432 = vunpack.c.l.b16 %v1396
        %v1433 = vpack.c.b16 %v1418, %v1417
        %v1434 = vpack.c.b16 %v1420, %v1419
        %v1435 = vpack.c.b16 %v1422, %v1421
        %v1436 = vpack.c.b16 %v1424, %v1423
        %v1437 = vpack.c.b16 %v1426, %v1425
        %v1438 = vpack.c.b16 %v1428, %v1427
        %v1439 = vpack.c.b16 %v1430, %v1429
        %v1440 = vpack.c.b16 %v1432, %v1431
        %1449 = vmatpush.bf16.msra.mxu0 %v1440
        %1450 = vmatpush.bf16.msra.mxu0 %v1439
        %1451 = vmatpush.bf16.msra.mxu0 %v1438
        %1452 = vmatpush.bf16.msra.mxu0 %v1437
        %1453 = vmatpush.bf16.msra.mxu0 %v1436
        %1454 = vmatpush.bf16.msra.mxu0 %v1435
        %1455 = vmatpush.bf16.msra.mxu0 %v1434
        %1456 = vmatpush.bf16.msra.mxu0 %v1433
        %1457 = vmatmul.bf16.gmra.mxu0 %v1380
        %v1458 = vpop.f32.mrf.mxu0
        %v1459 = vadd.f32 %v1399, %v1458
        %v1460 = vpop.f32.mrf.mxu0
        %v1461 = vadd.f32 %v1399, %v1460
        %1462 = vdwg.mxu0
        %v1463 = vadd.f32 %v641, %v1459
        %v1464 = vadd.f32 %v642, %v1461
        %v1465 = vld [vmem:[%s12] sm:$0x1]
        %v1466 = vld [vmem:[%s13] sm:$0x1]
        %1467 = vadd.xlane.f32.xlu0 %v1463
        %v1468 = vpop.xlane.xlu0 %1467
        %1469 = vadd.xlane.f32.xlu0 %v1464
        %v1470 = vpop.xlane.xlu0 %1469
        %v1471 = vrcp.pop 128.0
        %v1472 = vmul.f32 128.0, %v1471
        %v1473 = vsub.f32 1.0, %v1472
        %v1474 = vmul.f32 %v1471, %v1473
        %v1475 = vadd.f32 %v1471, %v1474
        %vm1476 = vweird.f32 %v1471
        %v1477 = vsel %vm1476, %v1471, %v1475
        %v1478 = vmul.f32 %v1468, %v1477
        %v1479 = vmul.f32 %v1470, %v1477
        %v1480 = vsub.f32 %v1463, %v1478
        %v1481 = vsub.f32 %v1464, %v1479
        %v1482 = vmul.f32 %v1480, %v1480
        %v1483 = vmul.f32 %v1481, %v1481
        %1484 = vadd.xlane.f32.xlu0 %v1482
        %v1485 = vpop.xlane.xlu0 %1484
        %1486 = vadd.xlane.f32.xlu0 %v1483
        %v1487 = vpop.xlane.xlu0 %1486
        %v1488 = vmul.f32 %v1485, 0.007874016
        %v1489 = vmul.f32 %v1487, 0.007874016
        %v1490 = vrsqrt.pop %v1488
        %v1491 = vmul.f32 %v1490, %v1488
        %v1492 = vmul.f32 %v1491, %v1490
        %v1493 = vmul.f32 0.5, %v1492
        %v1494 = vsub.f32 1.5, %v1493
        %v1495 = vmul.f32 %v1490, %v1494
        %v1496 = vmul.f32 %v1488, %v1495
        %vm1497 = vcmp.eq.f32.partialorder %v1488, inf
        %v1498 = vsel %vm1497, %v1488, %v1496
        %vm1499 = vcmp.eq.f32.partialorder %v1488, 0.0
        %v1500 = vand.u32 %v1488, 2147483648
        %v1501 = vsel %vm1499, %v1500, %v1498
        %v1502 = vrsqrt.pop %v1489
        %v1503 = vmul.f32 %v1502, %v1489
        %v1504 = vmul.f32 %v1503, %v1502
        %v1505 = vmul.f32 0.5, %v1504
        %v1506 = vsub.f32 1.5, %v1505
        %v1507 = vmul.f32 %v1502, %v1506
        %v1508 = vmul.f32 %v1489, %v1507
        %vm1509 = vcmp.eq.f32.partialorder %v1489, inf
        %v1510 = vsel %vm1509, %v1489, %v1508
        %vm1511 = vcmp.eq.f32.partialorder %v1489, 0.0
        %v1512 = vand.u32 %v1489, 2147483648
        %v1513 = vsel %vm1511, %v1512, %v1510
        %v1514 = vadd.f32 %v1501, 1e-06
        %v1515 = vadd.f32 %v1513, 1e-06
        %v1516 = vrcp.pop %v1514
        %v1517 = vmul.f32 %v1514, %v1516
        %v1518 = vsub.f32 1.0, %v1517
        %v1519 = vmul.f32 %v1516, %v1518
        %v1520 = vadd.f32 %v1516, %v1519
        %vm1521 = vweird.f32 %v1514
        %vm1522 = vweird.f32 %v1516
        %vm1523 = vmor %vm1521, %vm1522
        %v1524 = vsel %vm1523, %v1516, %v1520
        %v1525 = vand.u32 2147483647, %v1514
        %vm1526 = vcmp.eq.f32.partialorder %v1525, 8.507059e+37
        %v1527 = vand.u32 %v1514, 2147483648
        %v1528 = vor.u32 1.1754944e-38, %v1527
        %v1529 = vsel %vm1526, %v1528, %v1524
        %v1530 = vrcp.pop %v1515
        %v1531 = vmul.f32 %v1515, %v1530
        %v1532 = vsub.f32 1.0, %v1531
        %v1533 = vmul.f32 %v1530, %v1532
        %v1534 = vadd.f32 %v1530, %v1533
        %vm1535 = vweird.f32 %v1515
        %vm1536 = vweird.f32 %v1530
        %vm1537 = vmor %vm1535, %vm1536
        %v1538 = vsel %vm1537, %v1530, %v1534
        %v1539 = vand.u32 2147483647, %v1515
        %vm1540 = vcmp.eq.f32.partialorder %v1539, 8.507059e+37
        %v1541 = vand.u32 %v1515, 2147483648
        %v1542 = vor.u32 1.1754944e-38, %v1541
        %v1543 = vsel %vm1540, %v1542, %v1538
        %v1544 = vmul.f32 %v1480, %v1529
        %v1545 = vmul.f32 %v1481, %v1543
        %v1547 = vperm.slane %v1465, 0
        %v1549 = vmul.f32 %v1547, %v1544
        %v1550 = vmul.f32 %v1547, %v1545
        %v1552 = vperm.slane %v1466, 0
        %v1554 = vadd.f32 %v1549, %v1552
        %v1555 = vadd.f32 %v1550, %v1552
        %v1556 = vpack.c.bf16 %v1555, %v1554
        %v1557 = vld [vmem:[#allocation13] sm:$0xff]
        %v1558 = vld [vmem:[#allocation13 + $0x8] sm:$0xff]
        %v1559 = vld [vmem:[#allocation13 + $0x10] sm:$0xff]
        %v1560 = vld [vmem:[#allocation13 + $0x18] sm:$0xff]
        %v1561 = vld [vmem:[#allocation13 + $0x20] sm:$0xff]
        %v1562 = vld [vmem:[#allocation13 + $0x28] sm:$0xff]
        %v1563 = vld [vmem:[#allocation13 + $0x30] sm:$0xff]
        %v1564 = vld [vmem:[#allocation13 + $0x38] sm:$0xff]
        %v1565 = vld [vmem:[#allocation13 + $0x40] sm:$0xff]
        %v1566 = vld [vmem:[#allocation13 + $0x48] sm:$0xff]
        %v1567 = vld [vmem:[#allocation13 + $0x50] sm:$0xff]
        %v1568 = vld [vmem:[#allocation13 + $0x58] sm:$0xff]
        %v1569 = vld [vmem:[#allocation13 + $0x60] sm:$0xff]
        %v1570 = vld [vmem:[#allocation13 + $0x68] sm:$0xff]
        %v1571 = vld [vmem:[#allocation13 + $0x70] sm:$0xff]
        %v1572 = vld [vmem:[#allocation13 + $0x78] sm:$0xff]
        %v1573 = vld [vmem:[%s9] sm:$0x3]
        %v1575 = vperm.slane %v1573, 0
        %v1576 = vperm.slane %v1573, 1
        %v1595 = vunpack.c.l.b16 %v1557
        %v1596 = vunpack.c.h.b16 %v1557
        %v1597 = vunpack.c.l.b16 %v1558
        %v1598 = vunpack.c.h.b16 %v1558
        %v1599 = vunpack.c.l.b16 %v1559
        %v1600 = vunpack.c.h.b16 %v1559
        %v1601 = vunpack.c.l.b16 %v1560
        %v1602 = vunpack.c.h.b16 %v1560
        %v1603 = vunpack.c.l.b16 %v1561
        %v1604 = vunpack.c.h.b16 %v1561
        %v1605 = vunpack.c.l.b16 %v1562
        %v1606 = vunpack.c.h.b16 %v1562
        %v1607 = vunpack.c.l.b16 %v1563
        %v1608 = vunpack.c.h.b16 %v1563
        %v1609 = vunpack.c.l.b16 %v1564
        %v1610 = vunpack.c.h.b16 %v1564
        %v1611 = vunpack.c.l.b16 %v1565
        %v1612 = vunpack.c.h.b16 %v1565
        %v1613 = vunpack.c.l.b16 %v1566
        %v1614 = vunpack.c.h.b16 %v1566
        %v1615 = vunpack.c.l.b16 %v1567
        %v1616 = vunpack.c.h.b16 %v1567
        %v1617 = vunpack.c.l.b16 %v1568
        %v1618 = vunpack.c.h.b16 %v1568
        %v1619 = vunpack.c.l.b16 %v1569
        %v1620 = vunpack.c.h.b16 %v1569
        %v1621 = vunpack.c.l.b16 %v1570
        %v1622 = vunpack.c.h.b16 %v1570
        %v1623 = vunpack.c.l.b16 %v1571
        %v1624 = vunpack.c.h.b16 %v1571
        %v1625 = vunpack.c.l.b16 %v1572
        %v1626 = vunpack.c.h.b16 %v1572
        %v1627 = vpack.c.b16 %v1597, %v1595
        %v1628 = vpack.c.b16 %v1598, %v1596
        %v1629 = vpack.c.b16 %v1601, %v1599
        %v1630 = vpack.c.b16 %v1602, %v1600
        %v1631 = vpack.c.b16 %v1605, %v1603
        %v1632 = vpack.c.b16 %v1606, %v1604
        %v1633 = vpack.c.b16 %v1609, %v1607
        %v1634 = vpack.c.b16 %v1610, %v1608
        %v1635 = vpack.c.b16 %v1613, %v1611
        %v1636 = vpack.c.b16 %v1614, %v1612
        %v1637 = vpack.c.b16 %v1617, %v1615
        %v1638 = vpack.c.b16 %v1618, %v1616
        %v1639 = vpack.c.b16 %v1621, %v1619
        %v1640 = vpack.c.b16 %v1622, %v1620
        %v1641 = vpack.c.b16 %v1625, %v1623
        %v1642 = vpack.c.b16 %v1626, %v1624
        %1659 = vmatpush.bf16.msra.mxu0 %v1641
        %1660 = vmatpush.bf16.msra.mxu0 %v1639
        %1661 = vmatpush.bf16.msra.mxu0 %v1637
        %1662 = vmatpush.bf16.msra.mxu0 %v1635
        %1663 = vmatpush.bf16.msra.mxu0 %v1633
        %1664 = vmatpush.bf16.msra.mxu0 %v1631
        %1665 = vmatpush.bf16.msra.mxu0 %v1629
        %1666 = vmatpush.bf16.msra.mxu0 %v1627
        %1667 = vmatmul.bf16.gmra.mxu0 %v1556
        %v1668 = vpop.f32.mrf.mxu0
        %v1669 = vadd.f32 %v1575, %v1668
        %v1670 = vpop.f32.mrf.mxu0
        %v1671 = vadd.f32 %v1575, %v1670
        %1672 = vdwg.mxu0
        %1673 = vmatpush.bf16.msra.mxu0 %v1642
        %1674 = vmatpush.bf16.msra.mxu0 %v1640
        %1675 = vmatpush.bf16.msra.mxu0 %v1638
        %1676 = vmatpush.bf16.msra.mxu0 %v1636
        %1677 = vmatpush.bf16.msra.mxu0 %v1634
        %1678 = vmatpush.bf16.msra.mxu0 %v1632
        %1679 = vmatpush.bf16.msra.mxu0 %v1630
        %1680 = vmatpush.bf16.msra.mxu0 %v1628
        %1681 = vmatmul.bf16.gmra.mxu0 %v1556
        %v1682 = vpop.f32.mrf.mxu0
        %v1683 = vadd.f32 %v1576, %v1682
        %v1684 = vpop.f32.mrf.mxu0
        %v1685 = vadd.f32 %v1576, %v1684
        %1686 = vdwg.mxu0
        %v1687 = vmax.f32 %v1669, 0.0
        %v1688 = vmax.f32 %v1683, 0.0
        %v1689 = vmax.f32 %v1671, 0.0
        %v1690 = vmax.f32 %v1685, 0.0
        %v1691 = vpack.c.bf16 %v1689, %v1687
        %v1692 = vpack.c.bf16 %v1690, %v1688
        %v1693 = vld [vmem:[#allocation14] sm:$0xf]
        %v1694 = vld [vmem:[#allocation14 + $0x4] sm:$0xf]
        %v1695 = vld [vmem:[#allocation14 + $0x8] sm:$0xf]
        %v1696 = vld [vmem:[#allocation14 + $0xc] sm:$0xf]
        %v1697 = vld [vmem:[#allocation14 + $0x10] sm:$0xf]
        %v1698 = vld [vmem:[#allocation14 + $0x14] sm:$0xf]
        %v1699 = vld [vmem:[#allocation14 + $0x18] sm:$0xf]
        %v1700 = vld [vmem:[#allocation14 + $0x1c] sm:$0xf]
        %v1701 = vld [vmem:[#allocation14 + $0x20] sm:$0xf]
        %v1702 = vld [vmem:[#allocation14 + $0x24] sm:$0xf]
        %v1703 = vld [vmem:[#allocation14 + $0x28] sm:$0xf]
        %v1704 = vld [vmem:[#allocation14 + $0x2c] sm:$0xf]
        %v1705 = vld [vmem:[#allocation14 + $0x30] sm:$0xf]
        %v1706 = vld [vmem:[#allocation14 + $0x34] sm:$0xf]
        %v1707 = vld [vmem:[#allocation14 + $0x38] sm:$0xf]
        %v1708 = vld [vmem:[#allocation14 + $0x3c] sm:$0xf]
        %v1709 = vld [vmem:[#allocation14 + $0x40] sm:$0xf]
        %v1710 = vld [vmem:[#allocation14 + $0x44] sm:$0xf]
        %v1711 = vld [vmem:[#allocation14 + $0x48] sm:$0xf]
        %v1712 = vld [vmem:[#allocation14 + $0x4c] sm:$0xf]
        %v1713 = vld [vmem:[#allocation14 + $0x50] sm:$0xf]
        %v1714 = vld [vmem:[#allocation14 + $0x54] sm:$0xf]
        %v1715 = vld [vmem:[#allocation14 + $0x58] sm:$0xf]
        %v1716 = vld [vmem:[#allocation14 + $0x5c] sm:$0xf]
        %v1717 = vld [vmem:[#allocation14 + $0x60] sm:$0xf]
        %v1718 = vld [vmem:[#allocation14 + $0x64] sm:$0xf]
        %v1719 = vld [vmem:[#allocation14 + $0x68] sm:$0xf]
        %v1720 = vld [vmem:[#allocation14 + $0x6c] sm:$0xf]
        %v1721 = vld [vmem:[#allocation14 + $0x70] sm:$0xf]
        %v1722 = vld [vmem:[#allocation14 + $0x74] sm:$0xf]
        %v1723 = vld [vmem:[#allocation14 + $0x78] sm:$0xf]
        %v1724 = vld [vmem:[#allocation14 + $0x7c] sm:$0xf]
        %v1725 = vld [vmem:[%s11] sm:$0x1]
        %v1727 = vperm.slane %v1725, 0
        %v1761 = vunpack.c.l.b16 %v1693
        %v1762 = vunpack.c.l.b16 %v1694
        %v1763 = vunpack.c.l.b16 %v1695
        %v1764 = vunpack.c.l.b16 %v1696
        %v1765 = vunpack.c.l.b16 %v1697
        %v1766 = vunpack.c.l.b16 %v1698
        %v1767 = vunpack.c.l.b16 %v1699
        %v1768 = vunpack.c.l.b16 %v1700
        %v1769 = vunpack.c.l.b16 %v1701
        %v1770 = vunpack.c.l.b16 %v1702
        %v1771 = vunpack.c.l.b16 %v1703
        %v1772 = vunpack.c.l.b16 %v1704
        %v1773 = vunpack.c.l.b16 %v1705
        %v1774 = vunpack.c.l.b16 %v1706
        %v1775 = vunpack.c.l.b16 %v1707
        %v1776 = vunpack.c.l.b16 %v1708
        %v1777 = vunpack.c.l.b16 %v1709
        %v1778 = vunpack.c.l.b16 %v1710
        %v1779 = vunpack.c.l.b16 %v1711
        %v1780 = vunpack.c.l.b16 %v1712
        %v1781 = vunpack.c.l.b16 %v1713
        %v1782 = vunpack.c.l.b16 %v1714
        %v1783 = vunpack.c.l.b16 %v1715
        %v1784 = vunpack.c.l.b16 %v1716
        %v1785 = vunpack.c.l.b16 %v1717
        %v1786 = vunpack.c.l.b16 %v1718
        %v1787 = vunpack.c.l.b16 %v1719
        %v1788 = vunpack.c.l.b16 %v1720
        %v1789 = vunpack.c.l.b16 %v1721
        %v1790 = vunpack.c.l.b16 %v1722
        %v1791 = vunpack.c.l.b16 %v1723
        %v1792 = vunpack.c.l.b16 %v1724
        %v1793 = vpack.c.b16 %v1762, %v1761
        %v1794 = vpack.c.b16 %v1764, %v1763
        %v1795 = vpack.c.b16 %v1766, %v1765
        %v1796 = vpack.c.b16 %v1768, %v1767
        %v1797 = vpack.c.b16 %v1770, %v1769
        %v1798 = vpack.c.b16 %v1772, %v1771
        %v1799 = vpack.c.b16 %v1774, %v1773
        %v1800 = vpack.c.b16 %v1776, %v1775
        %v1801 = vpack.c.b16 %v1778, %v1777
        %v1802 = vpack.c.b16 %v1780, %v1779
        %v1803 = vpack.c.b16 %v1782, %v1781
        %v1804 = vpack.c.b16 %v1784, %v1783
        %v1805 = vpack.c.b16 %v1786, %v1785
        %v1806 = vpack.c.b16 %v1788, %v1787
        %v1807 = vpack.c.b16 %v1790, %v1789
        %v1808 = vpack.c.b16 %v1792, %v1791
        %1825 = vmatpush.bf16.msra.mxu0 %v1800
        %1826 = vmatpush.bf16.msra.mxu0 %v1799
        %1827 = vmatpush.bf16.msra.mxu0 %v1798
        %1828 = vmatpush.bf16.msra.mxu0 %v1797
        %1829 = vmatpush.bf16.msra.mxu0 %v1796
        %1830 = vmatpush.bf16.msra.mxu0 %v1795
        %1831 = vmatpush.bf16.msra.mxu0 %v1794
        %1832 = vmatpush.bf16.msra.mxu0 %v1793
        %1833 = vmatmul.bf16.gmra.mxu0 %v1691
        %v1834 = vpop.f32.mrf.mxu0
        %v1835 = vadd.f32 %v1727, %v1834
        %v1836 = vpop.f32.mrf.mxu0
        %v1837 = vadd.f32 %v1727, %v1836
        %1838 = vdwg.mxu0
        %1839 = vmatpush.bf16.msra.mxu0 %v1808
        %1840 = vmatpush.bf16.msra.mxu0 %v1807
        %1841 = vmatpush.bf16.msra.mxu0 %v1806
        %1842 = vmatpush.bf16.msra.mxu0 %v1805
        %1843 = vmatpush.bf16.msra.mxu0 %v1804
        %1844 = vmatpush.bf16.msra.mxu0 %v1803
        %1845 = vmatpush.bf16.msra.mxu0 %v1802
        %1846 = vmatpush.bf16.msra.mxu0 %v1801
        %1847 = vmatmul.bf16.gmra.mxu0 %v1692
        %v1848 = vpop.f32.mrf.mxu0
        %v1849 = vadd.f32 %v1835, %v1848
        %v1850 = vpop.f32.mrf.mxu0
        %v1851 = vadd.f32 %v1837, %v1850
        %1852 = vdwg.mxu0
        %v1853 = vadd.f32 %v1554, %v1849
        %v1854 = vadd.f32 %v1555, %v1851
        %v1855 = vld [vmem:[%s14] sm:$0x1]
        %v1856 = vld [vmem:[%s15] sm:$0x1]
        %1857 = vadd.xlane.f32.xlu0 %v1853
        %v1858 = vpop.xlane.xlu0 %1857
        %1859 = vadd.xlane.f32.xlu0 %v1854
        %v1860 = vpop.xlane.xlu0 %1859
        %v1861 = vmul.f32 %v1858, %v1477
        %v1862 = vmul.f32 %v1860, %v1477
        %v1863 = vsub.f32 %v1853, %v1861
        %v1864 = vsub.f32 %v1854, %v1862
        %v1865 = vmul.f32 %v1863, %v1863
        %v1866 = vmul.f32 %v1864, %v1864
        %1867 = vadd.xlane.f32.xlu0 %v1865
        %v1868 = vpop.xlane.xlu0 %1867
        %1869 = vadd.xlane.f32.xlu0 %v1866
        %v1870 = vpop.xlane.xlu0 %1869
        %v1871 = vmul.f32 %v1868, 0.007874016
        %v1872 = vmul.f32 %v1870, 0.007874016
        %v1873 = vrsqrt.pop %v1871
        %v1874 = vmul.f32 %v1873, %v1871
        %v1875 = vmul.f32 %v1874, %v1873
        %v1876 = vmul.f32 0.5, %v1875
        %v1877 = vsub.f32 1.5, %v1876
        %v1878 = vmul.f32 %v1873, %v1877
        %v1879 = vmul.f32 %v1871, %v1878
        %vm1880 = vcmp.eq.f32.partialorder %v1871, inf
        %v1881 = vsel %vm1880, %v1871, %v1879
        %vm1882 = vcmp.eq.f32.partialorder %v1871, 0.0
        %v1883 = vand.u32 %v1871, 2147483648
        %v1884 = vsel %vm1882, %v1883, %v1881
        %v1885 = vrsqrt.pop %v1872
        %v1886 = vmul.f32 %v1885, %v1872
        %v1887 = vmul.f32 %v1886, %v1885
        %v1888 = vmul.f32 0.5, %v1887
        %v1889 = vsub.f32 1.5, %v1888
        %v1890 = vmul.f32 %v1885, %v1889
        %v1891 = vmul.f32 %v1872, %v1890
        %vm1892 = vcmp.eq.f32.partialorder %v1872, inf
        %v1893 = vsel %vm1892, %v1872, %v1891
        %vm1894 = vcmp.eq.f32.partialorder %v1872, 0.0
        %v1895 = vand.u32 %v1872, 2147483648
        %v1896 = vsel %vm1894, %v1895, %v1893
        %v1897 = vadd.f32 %v1884, 1e-06
        %v1898 = vadd.f32 %v1896, 1e-06
        %v1899 = vrcp.pop %v1897
        %v1900 = vmul.f32 %v1897, %v1899
        %v1901 = vsub.f32 1.0, %v1900
        %v1902 = vmul.f32 %v1899, %v1901
        %v1903 = vadd.f32 %v1899, %v1902
        %vm1904 = vweird.f32 %v1897
        %vm1905 = vweird.f32 %v1899
        %vm1906 = vmor %vm1904, %vm1905
        %v1907 = vsel %vm1906, %v1899, %v1903
        %v1908 = vand.u32 2147483647, %v1897
        %vm1909 = vcmp.eq.f32.partialorder %v1908, 8.507059e+37
        %v1910 = vand.u32 %v1897, 2147483648
        %v1911 = vor.u32 1.1754944e-38, %v1910
        %v1912 = vsel %vm1909, %v1911, %v1907
        %v1913 = vrcp.pop %v1898
        %v1914 = vmul.f32 %v1898, %v1913
        %v1915 = vsub.f32 1.0, %v1914
        %v1916 = vmul.f32 %v1913, %v1915
        %v1917 = vadd.f32 %v1913, %v1916
        %vm1918 = vweird.f32 %v1898
        %vm1919 = vweird.f32 %v1913
        %vm1920 = vmor %vm1918, %vm1919
        %v1921 = vsel %vm1920, %v1913, %v1917
        %v1922 = vand.u32 2147483647, %v1898
        %vm1923 = vcmp.eq.f32.partialorder %v1922, 8.507059e+37
        %v1924 = vand.u32 %v1898, 2147483648
        %v1925 = vor.u32 1.1754944e-38, %v1924
        %v1926 = vsel %vm1923, %v1925, %v1921
        %v1927 = vmul.f32 %v1863, %v1912
        %v1928 = vmul.f32 %v1864, %v1926
        %v1930 = vperm.slane %v1855, 0
        %v1932 = vmul.f32 %v1930, %v1927
        %v1933 = vmul.f32 %v1930, %v1928
        %v1935 = vperm.slane %v1856, 0
        %v1937 = vadd.f32 %v1932, %v1935
        %v1938 = vadd.f32 %v1933, %v1935
        %1939 = vst [vmem:[%s630] sm:$0xff] %v1937
        %1940 = vst [vmem:[%s630 + $0x8] sm:$0xff] %v1938
        %s1941 = sand.u32 %s379, 1
        %s1942 = scalar_lea.sflag [#allocation4], %s1941
        %s1943 = sand.u32 %s379, 1
        %s1944 = smul.addr %s1943, 16
        %s1945 = scalar_lea.vmem [#allocation16], %s1944
        // Predicated region
        $region117: #{tpu_custom_call.1} parent=83 // pred_check
          %p1946 = pneg %p389
        $region118: #{tpu_custom_call.1} parent=83 // pred_check_branch
          %1948 = sbr.rel (%p1946) target = $region120
        $region119: #{tpu_custom_call.1} parent=83 // pred_region
          %s1949 = smul.u32 2, %s35
          %1951 = vsyncadd %s1942, 0
          %s1952 = smul.addr %s1949, 8
          %s1953 = scalar_lea.hbm %s16, %s1952
          %s1954 = sshll.u32 %s1945, 4
          %s1955 = int_to_ptr.vmem [resolvable:$true] %s1954
          %s1956 = sshll.u32 %s1953, 4
          %s1957 = int_to_ptr.hbm [resolvable:$true] %s1956
          %1962 = dma.vmem_to_hbm [thread:$0]  %s1955, 256, %s1957, %s1942, 128, 128, 8
        $region120: #{tpu_custom_call.1} parent=83 // pred_fallthru
          _
      $region84: #{tpu_custom_call.1} parent=5 // pred_fallthru
        _
      %p1963 = scmp.le.s32.totalorder 2, %s30
      // Predicated region
      $region121: #{tpu_custom_call.1} parent=5 // pred_check
        %p1964 = pneg %p1963
      $region122: #{tpu_custom_call.1} parent=5 // pred_check_branch
        %1966 = sbr.rel (%p1964) target = $region124
      $region123: #{tpu_custom_call.1} parent=5 // pred_region
        %s1967 = ssub.s32 %s30, 2
        // Predicated region
        $region125: #{tpu_custom_call.1} parent=123 // pred_check
          %p1968 = pneg %p395
        $region126: #{tpu_custom_call.1} parent=123 // pred_check_branch
          %1970 = sbr.rel (%p1968) target = $region128
        $region127: #{tpu_custom_call.1} parent=123 // pred_region
          %s1971 = sand.u32 %s380, 1
          %s1972 = scalar_lea.sflag [#allocation4], %s1971
          %s1973 = sand.u32 %s380, 1
          %s1974 = smul.addr %s1973, 16
          %s1975 = scalar_lea.vmem [#allocation16], %s1974
          %1977 = dma.done %s1972, 256
        $region128: #{tpu_custom_call.1} parent=123 // pred_fallthru
          _
      $region124: #{tpu_custom_call.1} parent=5 // pred_fallthru
        _
    $region6: #{tpu_custom_call.1} parent=1 // loop_footer
      %s34 = sadd.s32 1, %s30
    $region7: #{tpu_custom_call.1} parent=1 // loop_footer_branch
      %29 = sbr.rel target = $region3
    $region8: #{tpu_custom_call.1} parent=1 // loop_exit
      _
    %1978 = vsyncpa [#allocation3], 1
    %s1979 = scalar_lea.sflag [#allocation3], 1
    %1980 = vsyncpa %s1979, 1
    %1981 = vsyncpa [#allocation6], 1
    %1982 = vsyncpa [#allocation9], 1
    %1983 = vsyncpa [#allocation12], 1
    %1984 = vsyncpa [#allocation15], 1
    %1985 = vsyncpa [#allocation4], 1
    %s1986 = scalar_lea.sflag [#allocation4], 1
    %1987 = vsyncpa %s1986, 1

</llo_original>
